<compile_context>
chip_gen: v6e
topology: v6e:2x2x1
jax: 0.10.0
libtpu: 0.0.40
codegen_flags: <defaults>
</compile_context>

<pallas_src>
from functools import partial

import jax
import jax.numpy as jnp
import numpy as np
from jax.experimental import pallas as pl
from jax.experimental.pallas import tpu as pltpu

BN_EPS = 1e-5
VMEM_LIMIT_BYTES = 48 * 1024 * 1024     # safe vs physical VMEM on v5e/v6e (128 MiB) and v7x (64 MiB)
BLOCK_BUDGET_BYTES = 32 * 1024 * 1024   # per-grid-step block footprint target (incl. double buffers)


def _pick_lane_tile(total, bytes_per_lane, budget_bytes=BLOCK_BUDGET_BYTES):
    """Largest lane tile that divides `total` and fits the byte budget.

    Prefers multiples of 128 (dense, unmasked stores). Never exceeds the budget by falling back
    to `total`; if no 128-multiple divisor fits, it falls back to the largest plain divisor
    (masked stores, but still VMEM-safe and exact)."""
    if total * bytes_per_lane <= budget_bytes:
        return total
    cap = max(int(budget_bytes // bytes_per_lane), 1)
    t = (cap // 128) * 128
    while t >= 128:
        if total % t == 0:
            return t
        t -= 128
    for t in range(min(cap, total), 0, -1):
        if total % t == 0:
            return t
    return 1


# ----------------------------------------------------------------------------
# Kernel 1: fused 1x1 conv + BatchNorm2d + ReLU6.
# Channel-first, spatial on lanes: (Cout, Cin) @ (Cin, hw_t) -> lane-dense output.
# BN pre-folded into weight/bias (analytic batch stats, see wrapper). bf16 in, f32 acc/epilogue.
# ----------------------------------------------------------------------------
def _conv1x1_bn_act_kernel(x_ref, w_ref, b_ref, o_ref):
    y = jnp.dot(w_ref[...], x_ref[...], preferred_element_type=jnp.float32)
    o_ref[...] = jnp.clip(y + b_ref[...], 0.0, 6.0)


def conv1x1_bn_act(x_cf, w, b):
    # x_cf: (N, Cin, HW) bf16 ; w: (Cout, Cin) bf16 ; b: (Cout, 1) f32
    N, Cin, HW = x_cf.shape
    Cout = w.shape[0]
    hw_t = _pick_lane_tile(HW, 2 * (Cin * 2 + Cout * 4))     # double-buffered in + out per lane
    return pl.pallas_call(
        _conv1x1_bn_act_kernel,
        out_shape=jax.ShapeDtypeStruct((N, Cout, HW), jnp.float32),
        grid=(N, HW // hw_t),
        in_specs=[
            pl.BlockSpec((pl.Squeezed(), Cin, hw_t), lambda n, j: (n, 0, j)),
            pl.BlockSpec((Cout, Cin), lambda n, j: (0, 0)),
            pl.BlockSpec((Cout, 1), lambda n, j: (0, 0)),
        ],
        out_specs=pl.BlockSpec((pl.Squeezed(), Cout, hw_t), lambda n, j: (n, 0, j)),
        compiler_params=pltpu.CompilerParams(
            dimension_semantics=("parallel", "parallel"),
            vmem_limit_bytes=VMEM_LIMIT_BYTES),
    )(x_cf, w, b)


# ----------------------------------------------------------------------------
# Kernel 2: depth-collapsed 3x3x3 conv == three 3x3 2-D convs (first / interior / last output
# depth), all evaluated as ONE channel-first matmul per hw-tile on a 9-tap im2col:
#   y(3*Cout, hw_t) = w2(3*Cout, 9*C) @ xcat(9*C, hw_t)      (bf16 in, f32 acc)
# The BN3d per-slab moments (sum, sum of squares over hw) are emitted as tiny extra outputs so no
# later pass over y is needed.
# ----------------------------------------------------------------------------
def _conv3x3_im2col_kernel(x_ref, w_ref, y_ref, s1_ref, s2_ref):
    y = jnp.dot(w_ref[...], x_ref[...], preferred_element_type=jnp.float32)   # (3*Cout, hw_t)
    y_ref[...] = y
    s1_ref[...] = jnp.sum(y, axis=1, keepdims=True)          # (3*Cout, 1)
    s2_ref[...] = jnp.sum(y * y, axis=1, keepdims=True)      # (3*Cout, 1)


def conv3x3_im2col(xcat, w2):
    # xcat: (N, 9*C, HW) bf16 ; w2: (3*Cout, 9*C) bf16
    N, C9, HW = xcat.shape
    Cout3 = w2.shape[0]
    hw_t = _pick_lane_tile(HW, 2 * (C9 * 2 + Cout3 * 4))
    nj = HW // hw_t
    return pl.pallas_call(
        _conv3x3_im2col_kernel,
        out_shape=(jax.ShapeDtypeStruct((N, Cout3, HW), jnp.float32),
                   jax.ShapeDtypeStruct((N, nj, Cout3, 1), jnp.float32),
                   jax.ShapeDtypeStruct((N, nj, Cout3, 1), jnp.float32)),
        grid=(N, nj),
        in_specs=[
            pl.BlockSpec((pl.Squeezed(), C9, hw_t), lambda n, j: (n, 0, j)),
            pl.BlockSpec((Cout3, C9), lambda n, j: (0, 0)),
        ],
        out_specs=(
            pl.BlockSpec((pl.Squeezed(), Cout3, hw_t), lambda n, j: (n, 0, j)),
            pl.BlockSpec((pl.Squeezed(), pl.Squeezed(), Cout3, 1), lambda n, j: (n, j, 0, 0)),
            pl.BlockSpec((pl.Squeezed(), pl.Squeezed(), Cout3, 1), lambda n, j: (n, j, 0, 0)),
        ),
        compiler_params=pltpu.CompilerParams(
            dimension_semantics=("parallel", "parallel"),
            vmem_limit_bytes=VMEM_LIMIT_BYTES),
    )(xcat, w2)


# ----------------------------------------------------------------------------
# Kernel 3: fused BatchNorm3d + ReLU6 + depth expansion.
# Reads the three slabs once per (n, cout-block, hw-block) and writes the final output directly in
# (N, Cout, D, HW) layout (lane dim = HW, unmasked stores); the NCDHW result is a free reshape.
# A Cout grid axis keeps the hw lane tile large independent of D*Cout.
# ----------------------------------------------------------------------------
def _bn_act_expand_kernel(y_ref, scale_ref, shift_ref, o_ref, *, D):
    z = jnp.clip(y_ref[...] * scale_ref[...] + shift_ref[...], 0.0, 6.0)   # (3, co_t, hw_t)
    co_t, hw_t = z.shape[1], z.shape[2]
    o_ref[:, pl.ds(0, 1), :] = z[0][:, None, :]                            # d = 0
    if D > 2:                                                              # identical interior depths
        o_ref[:, pl.ds(1, D - 2), :] = jnp.broadcast_to(
            z[1][:, None, :], (co_t, D - 2, hw_t))
    if D >= 2:
        o_ref[:, pl.ds(D - 1, 1), :] = z[2][:, None, :]                    # d = D-1


def _pick_cout_tile(cout, target=16):
    if cout <= target:
        return cout
    for t in (16, 8):
        if cout % t == 0:
            return t
    return cout


def bn_act_depth_expand(y3v, scale3, shift3, D):
    # y3v: (N, 3, Cout, HW) f32 (free view of kernel-2 output) ; scale3/shift3: (1, Cout, 1) f32
    N, G, Cout, HW = y3v.shape
    co_t = _pick_cout_tile(Cout)
    # double-buffered input + output blocks plus the interior broadcast temp, per hw lane
    bytes_per_lane = 4 * co_t * (2 * (G + D) + max(D - 2, 0))
    hw_t = _pick_lane_tile(HW, bytes_per_lane)
    return pl.pallas_call(
        partial(_bn_act_expand_kernel, D=D),
        out_shape=jax.ShapeDtypeStruct((N, Cout, D, HW), jnp.float32),
        grid=(N, Cout // co_t, HW // hw_t),
        in_specs=[
            pl.BlockSpec((pl.Squeezed(), G, co_t, hw_t), lambda n, c, j: (n, 0, c, j)),
            pl.BlockSpec((1, co_t, 1), lambda n, c, j: (0, c, 0)),
            pl.BlockSpec((1, co_t, 1), lambda n, c, j: (0, c, 0)),
        ],
        out_specs=pl.BlockSpec((pl.Squeezed(), co_t, D, hw_t), lambda n, c, j: (n, c, 0, j)),
        compiler_params=pltpu.CompilerParams(
            dimension_semantics=("parallel", "parallel", "parallel"),
            vmem_limit_bytes=VMEM_LIMIT_BYTES),
    )(y3v, scale3, shift3)


# ----------------------------------------------------------------------------
# Full SkipUpSample3D forward (cbam=False)
# ----------------------------------------------------------------------------
def skip_upsample_3d(x_nchw, w_conv2d, w_conv3d, eps=BN_EPS):
    """x: (N, Cin, H, W); w_conv2d: (Cout, Cin, 1, 1); w_conv3d: (Cout, Cout, 3, 3, 3).
    Returns (N, Cout, D=H, H, W)."""
    N, Cin, H, W = x_nchw.shape
    Cout = w_conv2d.shape[0]
    C2 = w_conv3d.shape[1]                 # conv3d input channels (== Cout)
    HW = H * W
    D = H

    x_cf = x_nchw.astype(jnp.float32).reshape(N, Cin, HW)             # free reshape

    # --- BatchNorm2d batch stats derived analytically (the 1x1 conv is linear):
    #     E[y] = W1 E[x], E[y^2] = diag(W1 E[xx^T] W1^T).  BN folds into the conv. ---
    m = float(N * HW)
    mu_x = jnp.sum(x_cf, axis=(0, 2)) / m                             # (Cin,)
    exx = jnp.einsum('nct,ndt->cd', x_cf, x_cf) / m                   # (Cin, Cin)
    w1 = w_conv2d.reshape(Cout, Cin).astype(jnp.float32)
    mean2 = w1 @ mu_x
    var2 = jnp.maximum(jnp.einsum('oc,cd,od->o', w1, exx, w1) - mean2 * mean2, 0.0)
    inv2 = jax.lax.rsqrt(var2 + eps)
    w_fold = (w1 * inv2[:, None]).astype(jnp.bfloat16)
    b_fold = (-mean2 * inv2)[:, None]                                 # (Cout, 1) f32

    feat_cf = conv1x1_bn_act(x_cf.astype(jnp.bfloat16), w_fold, b_fold)   # (N, Cout, HW) f32

    # --- stage-2 prep: channel-first 9-tap im2col of the 2-D feature map (~9x one fmap, bf16) ---
    featp = jnp.pad(feat_cf.reshape(N, Cout, H, W),
                    ((0, 0), (0, 0), (1, 1), (1, 1)))                 # (N, C, H+2, W+2)
    xcat = jnp.concatenate(
        [featp[:, :, kh:kh + H, kw:kw + W].reshape(N, C2, HW)
         for kh in range(3) for kw in range(3)],
        axis=1).astype(jnp.bfloat16)                                  # (N, 9*C, HW)

    # --- exact depth-collapsed 3x3x3 weights (conv3d input is constant along depth) ---
    w3 = w_conv3d.astype(jnp.float32)                                 # [o, c, kd, kh, kw]
    if D >= 2:
        w_first = w3[:, :, 1] + w3[:, :, 2]                           # d = 0    (kd=0 hits pad)
        w_mid = w3.sum(axis=2)                                        # interior
        w_last = w3[:, :, 0] + w3[:, :, 1]                            # d = D-1  (kd=2 hits pad)
    else:
        w_first = w_mid = w_last = w3[:, :, 1]
    w_eff = jnp.stack([w_first, w_mid, w_last], axis=0)               # (3, Cout, C2, 3, 3)
    # rows ordered (slab, o) to match the channel-first output; cols (kh, kw, c) to match xcat.
    w2 = jnp.transpose(w_eff, (0, 1, 3, 4, 2)).reshape(3 * Cout, 9 * C2).astype(jnp.bfloat16)

    y2, s1, s2 = conv3x3_im2col(xcat, w2)      # (N, 3*Cout, HW) f32 + per-tile slab moments

    # --- BatchNorm3d batch stats from the slab moments, weighted by slab multiplicity (exact) ---
    counts = jnp.asarray([1.0, float(max(D - 2, 0)), 1.0 if D >= 2 else 0.0], dtype=jnp.float32)
    cnt = float(N * D * HW)
    sum1 = jnp.sum(s1, axis=(0, 1))[:, 0].reshape(3, Cout)
    sum2 = jnp.sum(s2, axis=(0, 1))[:, 0].reshape(3, Cout)
    mean3 = counts @ sum1 / cnt
    ey2 = counts @ sum2 / cnt
    var3 = jnp.maximum(ey2 - mean3 * mean3, 0.0)
    inv3 = jax.lax.rsqrt(var3 + eps)
    scale3 = inv3.reshape(1, Cout, 1)
    shift3 = (-mean3 * inv3).reshape(1, Cout, 1)

    y3v = y2.reshape(N, 3, Cout, HW)                                  # free metadata reshape
    out = bn_act_depth_expand(y3v, scale3, shift3, D)                 # (N, Cout, D, HW)
    return out.reshape(N, Cout, D, H, W)                              # free reshape -> NCDHW


# ----------------------------------------------------------------------------
# Pure-JAX reference (correctness check)
# ----------------------------------------------------------------------------
def reference(x_nchw, w_conv2d, w_conv3d, eps=BN_EPS):
    y = jax.lax.conv_general_dilated(
        x_nchw, w_conv2d, (1, 1), "SAME",
        dimension_numbers=("NCHW", "OIHW", "NCHW"))
    m = jnp.mean(y, axis=(0, 2, 3), keepdims=True)
    v = jnp.mean((y - m) ** 2, axis=(0, 2, 3), keepdims=True)
    y = jnp.clip((y - m) / jnp.sqrt(v + eps), 0.0, 6.0)

    N, C, H, W = y.shape
    y3 = jnp.broadcast_to(y[:, :, None], (N, C, H, H, W))
    z = jax.lax.conv_general_dilated(
        y3, w_conv3d, (1, 1, 1), "SAME",
        dimension_numbers=("NCDHW", "OIDHW", "NCDHW"))
    m = jnp.mean(z, axis=(0, 2, 3, 4), keepdims=True)
    v = jnp.mean((z - m) ** 2, axis=(0, 2, 3, 4), keepdims=True)
    return jnp.clip((z - m) / jnp.sqrt(v + eps), 0.0, 6.0)


if __name__ == "__main__":
    key = jax.random.PRNGKey(0)
    k_x, k_w2, k_w3 = jax.random.split(key, 3)

    N, Cin, Cout, H, W = 2, 4, 8, 16, 16
    x = jax.random.normal(k_x, (N, Cin, H, W), dtype=jnp.float32)
    w_conv2d = 0.10 * jax.random.normal(k_w2, (Cout, Cin, 1, 1), dtype=jnp.float32)
    w_conv3d = 0.05 * jax.random.normal(k_w3, (Cout, Cout, 3, 3, 3), dtype=jnp.float32)

    fwd = jax.jit(skip_upsample_3d)
    out = jax.block_until_ready(fwd(x, w_conv2d, w_conv3d))
    ref = jax.block_until_ready(reference(x, w_conv2d, w_conv3d))

    assert out.shape == (N, Cout, H, H, W), out.shape
    np.testing.assert_allclose(np.asarray(out), np.asarray(ref),
                               atol=2e-2, rtol=2e-2)
    print("KERNEL_OK")
</pallas_src>

<mosaic_0001>
module attributes {stable_mosaic.version = 11 : i64} {
  func.func @_conv1x1_bn_act_kernel(%arg0: i32, %arg1: i32, %arg2: memref<1x4x256xbf16, #tpu.memory_space<vmem>>, %arg3: memref<8x4xbf16, #tpu.memory_space<vmem>>, %arg4: memref<8x1xf32, #tpu.memory_space<vmem>>, %arg5: memref<1x8x256xf32, #tpu.memory_space<vmem>>) attributes {dimension_semantics = [#tpu.dimension_semantics<parallel>, #tpu.dimension_semantics<parallel>], iteration_bounds = array<i64: 2, 1>, scalar_prefetch = 0 : i64, scratch_operands = 0 : i64, tpu.core_type = #tpu.core_type<tc>, window_params = [{transform_indices = @transform_0, window_bounds = array<i64: 1, 4, 256>}, {pipeline_mode = #tpu.pipeline_mode<synchronous>, transform_indices = @transform_1, window_bounds = array<i64: 8, 4>}, {pipeline_mode = #tpu.pipeline_mode<synchronous>, transform_indices = @transform_2, window_bounds = array<i64: 8, 1>}, {transform_indices = @transform_3, window_bounds = array<i64: 1, 8, 256>}]} {
    %c0 = arith.constant 0 : index
    %c0_0 = arith.constant 0 : index
    %0 = vector.load %arg3[%c0, %c0_0] : memref<8x4xbf16, #tpu.memory_space<vmem>>, vector<8x4xbf16>
    %c0_1 = arith.constant 0 : index
    %c0_2 = arith.constant 0 : index
    %c0_3 = arith.constant 0 : index
    %1 = vector.load %arg2[%c0_1, %c0_2, %c0_3] : memref<1x4x256xbf16, #tpu.memory_space<vmem>>, vector<1x4x256xbf16>
    %2 = vector.shape_cast %1 : vector<1x4x256xbf16> to vector<4x256xbf16>
    %cst = arith.constant dense<0.000000e+00> : vector<8x256xf32>
    %3 = tpu.matmul %0, %2, %cst {dimension_numbers = #tpu.dot_dimension_numbers<[1], [0], [0], [1], [0, 0, 1, 1], [], []>} : vector<8x4xbf16>, vector<4x256xbf16>, vector<8x256xf32> -> vector<8x256xf32>
    %c0_4 = arith.constant 0 : index
    %c0_5 = arith.constant 0 : index
    %4 = vector.load %arg4[%c0_4, %c0_5] : memref<8x1xf32, #tpu.memory_space<vmem>>, vector<8x1xf32>
    %5 = vector.broadcast %4 : vector<8x1xf32> to vector<8x256xf32>
    %6 = arith.addf %3, %5 : vector<8x256xf32>
    %cst_6 = arith.constant 0.000000e+00 : f32
    %cst_7 = arith.constant 6.000000e+00 : f32
    %7 = vector.broadcast %cst_6 : f32 to vector<8x256xf32>
    %8 = arith.maximumf %7, %6 : vector<8x256xf32>
    %9 = vector.broadcast %cst_7 : f32 to vector<8x256xf32>
    %10 = arith.minimumf %9, %8 : vector<8x256xf32>
    %c0_8 = arith.constant 0 : index
    %c0_9 = arith.constant 0 : index
    %c0_10 = arith.constant 0 : index
    %11 = vector.load %arg5[%c0_8, %c0_9, %c0_10] : memref<1x8x256xf32, #tpu.memory_space<vmem>>, vector<1x8x256xf32>
    %12 = vector.shape_cast %11 : vector<1x8x256xf32> to vector<8x256xf32>
    %13 = vector.shape_cast %10 : vector<8x256xf32> to vector<1x8x256xf32>
    tpu.vector_store %arg5[%c0_8, %c0_9, %c0_10], %13 {strides = array<i32>} : memref<1x8x256xf32, #tpu.memory_space<vmem>>, vector<1x8x256xf32>,
    return
  }
  func.func @transform_0(%arg0: i32, %arg1: i32) -> (i32, i32, i32) {
    %c0_i32 = arith.constant 0 : i32
    %c0_i32_0 = arith.constant 0 : i32
    return %arg0, %c0_i32, %arg1 : i32, i32, i32
  }
  func.func @transform_1(%arg0: i32, %arg1: i32) -> (i32, i32) {
    %c0_i32 = arith.constant 0 : i32
    %c0_i32_0 = arith.constant 0 : i32
    %c0_i32_1 = arith.constant 0 : i32
    return %c0_i32, %c0_i32_0 : i32, i32
  }
  func.func @transform_2(%arg0: i32, %arg1: i32) -> (i32, i32) {
    %c0_i32 = arith.constant 0 : i32
    %c0_i32_0 = arith.constant 0 : i32
    %c0_i32_1 = arith.constant 0 : i32
    return %c0_i32, %c0_i32_0 : i32, i32
  }
  func.func @transform_3(%arg0: i32, %arg1: i32) -> (i32, i32, i32) {
    %c0_i32 = arith.constant 0 : i32
    %c0_i32_0 = arith.constant 0 : i32
    return %arg0, %c0_i32, %arg1 : i32, i32, i32
  }
}

module attributes {stable_mosaic.version = 11 : i64} {
  func.func @_conv3x3_im2col_kernel(%arg0: i32, %arg1: i32, %arg2: memref<1x72x256xbf16, #tpu.memory_space<vmem>>, %arg3: memref<24x72xbf16, #tpu.memory_space<vmem>>, %arg4: memref<1x24x256xf32, #tpu.memory_space<vmem>>, %arg5: memref<1x1x24x1xf32, #tpu.memory_space<vmem>>, %arg6: memref<1x1x24x1xf32, #tpu.memory_space<vmem>>) attributes {dimension_semantics = [#tpu.dimension_semantics<parallel>, #tpu.dimension_semantics<parallel>], iteration_bounds = array<i64: 2, 1>, scalar_prefetch = 0 : i64, scratch_operands = 0 : i64, tpu.core_type = #tpu.core_type<tc>, window_params = [{transform_indices = @transform_0, window_bounds = array<i64: 1, 72, 256>}, {pipeline_mode = #tpu.pipeline_mode<synchronous>, transform_indices = @transform_1, window_bounds = array<i64: 24, 72>}, {transform_indices = @transform_2, window_bounds = array<i64: 1, 24, 256>}, {transform_indices = @transform_3, window_bounds = array<i64: 1, 1, 24, 1>}, {transform_indices = @transform_4, window_bounds = array<i64: 1, 1, 24, 1>}]} {
    %c0 = arith.constant 0 : index
    %c0_0 = arith.constant 0 : index
    %0 = vector.load %arg3[%c0, %c0_0] : memref<24x72xbf16, #tpu.memory_space<vmem>>, vector<24x72xbf16>
    %c0_1 = arith.constant 0 : index
    %c0_2 = arith.constant 0 : index
    %c0_3 = arith.constant 0 : index
    %1 = vector.load %arg2[%c0_1, %c0_2, %c0_3] : memref<1x72x256xbf16, #tpu.memory_space<vmem>>, vector<1x72x256xbf16>
    %2 = vector.shape_cast %1 : vector<1x72x256xbf16> to vector<72x256xbf16>
    %cst = arith.constant dense<0.000000e+00> : vector<24x256xf32>
    %3 = tpu.matmul %0, %2, %cst {dimension_numbers = #tpu.dot_dimension_numbers<[1], [0], [0], [1], [0, 0, 1, 1], [], []>} : vector<24x72xbf16>, vector<72x256xbf16>, vector<24x256xf32> -> vector<24x256xf32>
    %c0_4 = arith.constant 0 : index
    %c0_5 = arith.constant 0 : index
    %c0_6 = arith.constant 0 : index
    %4 = vector.load %arg4[%c0_4, %c0_5, %c0_6] : memref<1x24x256xf32, #tpu.memory_space<vmem>>, vector<1x24x256xf32>
    %5 = vector.shape_cast %4 : vector<1x24x256xf32> to vector<24x256xf32>
    %6 = vector.shape_cast %3 : vector<24x256xf32> to vector<1x24x256xf32>
    tpu.vector_store %arg4[%c0_4, %c0_5, %c0_6], %6 {strides = array<i32>} : memref<1x24x256xf32, #tpu.memory_space<vmem>>, vector<1x24x256xf32>,
    %cst_7 = arith.constant dense<0.000000e+00> : vector<24xf32>
    %7 = vector.multi_reduction <add>, %3, %cst_7 [1] : vector<24x256xf32> to vector<24xf32>
    %8 = vector.shape_cast %7 : vector<24xf32> to vector<24x1xf32>
    %c0_8 = arith.constant 0 : index
    %c0_9 = arith.constant 0 : index
    %c0_10 = arith.constant 0 : index
    %c0_11 = arith.constant 0 : index
    %9 = vector.load %arg5[%c0_8, %c0_9, %c0_10, %c0_11] : memref<1x1x24x1xf32, #tpu.memory_space<vmem>>, vector<1x1x24x1xf32>
    %10 = vector.shape_cast %9 : vector<1x1x24x1xf32> to vector<24x1xf32>
    %11 = vector.shape_cast %8 : vector<24x1xf32> to vector<1x1x24x1xf32>
    tpu.vector_store %arg5[%c0_8, %c0_9, %c0_10, %c0_11], %11 {strides = array<i32>} : memref<1x1x24x1xf32, #tpu.memory_space<vmem>>, vector<1x1x24x1xf32>,
    %12 = arith.mulf %3, %3 : vector<24x256xf32>
    %cst_12 = arith.constant dense<0.000000e+00> : vector<24xf32>
    %13 = vector.multi_reduction <add>, %12, %cst_12 [1] : vector<24x256xf32> to vector<24xf32>
    %14 = vector.shape_cast %13 : vector<24xf32> to vector<24x1xf32>
    %c0_13 = arith.constant 0 : index
    %c0_14 = arith.constant 0 : index
    %c0_15 = arith.constant 0 : index
    %c0_16 = arith.constant 0 : index
    %15 = vector.load %arg6[%c0_13, %c0_14, %c0_15, %c0_16] : memref<1x1x24x1xf32, #tpu.memory_space<vmem>>, vector<1x1x24x1xf32>
    %16 = vector.shape_cast %15 : vector<1x1x24x1xf32> to vector<24x1xf32>
    %17 = vector.shape_cast %14 : vector<24x1xf32> to vector<1x1x24x1xf32>
    tpu.vector_store %arg6[%c0_13, %c0_14, %c0_15, %c0_16], %17 {strides = array<i32>} : memref<1x1x24x1xf32, #tpu.memory_space<vmem>>, vector<1x1x24x1xf32>,
    return
  }
  func.func @transform_0(%arg0: i32, %arg1: i32) -> (i32, i32, i32) {
    %c0_i32 = arith.constant 0 : i32
    %c0_i32_0 = arith.constant 0 : i32
    return %arg0, %c0_i32, %arg1 : i32, i32, i32
  }
  func.func @transform_1(%arg0: i32, %arg1: i32) -> (i32, i32) {
    %c0_i32 = arith.constant 0 : i32
    %c0_i32_0 = arith.constant 0 : i32
    %c0_i32_1 = arith.constant 0 : i32
    return %c0_i32, %c0_i32_0 : i32, i32
  }
  func.func @transform_2(%arg0: i32, %arg1: i32) -> (i32, i32, i32) {
    %c0_i32 = arith.constant 0 : i32
    %c0_i32_0 = arith.constant 0 : i32
    return %arg0, %c0_i32, %arg1 : i32, i32, i32
  }
  func.func @transform_3(%arg0: i32, %arg1: i32) -> (i32, i32, i32, i32) {
    %c0_i32 = arith.constant 0 : i32
    %c0_i32_0 = arith.constant 0 : i32
    %c0_i32_1 = arith.constant 0 : i32
    return %arg0, %arg1, %c0_i32, %c0_i32_0 : i32, i32, i32, i32
  }
  func.func @transform_4(%arg0: i32, %arg1: i32) -> (i32, i32, i32, i32) {
    %c0_i32 = arith.constant 0 : i32
    %c0_i32_0 = arith.constant 0 : i32
    %c0_i32_1 = arith.constant 0 : i32
    return %arg0, %arg1, %c0_i32, %c0_i32_0 : i32, i32, i32, i32
  }
}

module attributes {stable_mosaic.version = 11 : i64} {
  func.func @_bn_act_expand_kernel(%arg0: i32, %arg1: i32, %arg2: i32, %arg3: memref<1x3x8x256xf32, #tpu.memory_space<vmem>>, %arg4: memref<1x8x1xf32, #tpu.memory_space<vmem>>, %arg5: memref<1x8x1xf32, #tpu.memory_space<vmem>>, %arg6: memref<1x8x16x256xf32, #tpu.memory_space<vmem>>) attributes {dimension_semantics = [#tpu.dimension_semantics<parallel>, #tpu.dimension_semantics<parallel>, #tpu.dimension_semantics<parallel>], iteration_bounds = array<i64: 2, 1, 1>, scalar_prefetch = 0 : i64, scratch_operands = 0 : i64, tpu.core_type = #tpu.core_type<tc>, window_params = [{transform_indices = @transform_0, window_bounds = array<i64: 1, 3, 8, 256>}, {transform_indices = @transform_1, window_bounds = array<i64: 1, 8, 1>}, {transform_indices = @transform_2, window_bounds = array<i64: 1, 8, 1>}, {transform_indices = @transform_3, window_bounds = array<i64: 1, 8, 16, 256>}]} {
    %c0 = arith.constant 0 : index
    %c0_0 = arith.constant 0 : index
    %c0_1 = arith.constant 0 : index
    %c0_2 = arith.constant 0 : index
    %0 = vector.load %arg3[%c0, %c0_0, %c0_1, %c0_2] : memref<1x3x8x256xf32, #tpu.memory_space<vmem>>, vector<1x3x8x256xf32>
    %1 = vector.shape_cast %0 : vector<1x3x8x256xf32> to vector<3x8x256xf32>
    %c0_3 = arith.constant 0 : index
    %c0_4 = arith.constant 0 : index
    %c0_5 = arith.constant 0 : index
    %2 = vector.load %arg4[%c0_3, %c0_4, %c0_5] : memref<1x8x1xf32, #tpu.memory_space<vmem>>, vector<1x8x1xf32>
    %3 = vector.broadcast %2 : vector<1x8x1xf32> to vector<3x8x256xf32>
    %4 = arith.mulf %1, %3 : vector<3x8x256xf32>
    %c0_6 = arith.constant 0 : index
    %c0_7 = arith.constant 0 : index
    %c0_8 = arith.constant 0 : index
    %5 = vector.load %arg5[%c0_6, %c0_7, %c0_8] : memref<1x8x1xf32, #tpu.memory_space<vmem>>, vector<1x8x1xf32>
    %6 = vector.broadcast %5 : vector<1x8x1xf32> to vector<3x8x256xf32>
    %7 = arith.addf %4, %6 : vector<3x8x256xf32>
    %cst = arith.constant 0.000000e+00 : f32
    %cst_9 = arith.constant 6.000000e+00 : f32
    %8 = vector.broadcast %cst : f32 to vector<3x8x256xf32>
    %9 = arith.maximumf %8, %7 : vector<3x8x256xf32>
    %10 = vector.broadcast %cst_9 : f32 to vector<3x8x256xf32>
    %11 = arith.minimumf %10, %9 : vector<3x8x256xf32>
    %12 = vector.extract_strided_slice %11 {offsets = [0, 0, 0], sizes = [1, 8, 256], strides = [1, 1, 1]} : vector<3x8x256xf32> to vector<1x8x256xf32>
    %13 = vector.shape_cast %12 : vector<1x8x256xf32> to vector<8x256xf32>
    %14 = vector.shape_cast %13 : vector<8x256xf32> to vector<8x1x256xf32>
    %c0_10 = arith.constant 0 : index
    %c0_11 = arith.constant 0 : index
    %c0_12 = arith.constant 0 : index
    %c0_13 = arith.constant 0 : index
    %15 = vector.load %arg6[%c0_10, %c0_11, %c0_12, %c0_13] : memref<1x8x16x256xf32, #tpu.memory_space<vmem>>, vector<1x8x1x256xf32>
    %16 = vector.shape_cast %15 : vector<1x8x1x256xf32> to vector<8x1x256xf32>
    %17 = vector.shape_cast %14 : vector<8x1x256xf32> to vector<1x8x1x256xf32>
    tpu.vector_store %arg6[%c0_10, %c0_11, %c0_12, %c0_13], %17 {strides = array<i32>} : memref<1x8x16x256xf32, #tpu.memory_space<vmem>>, vector<1x8x1x256xf32>,
    %18 = vector.extract_strided_slice %11 {offsets = [1, 0, 0], sizes = [1, 8, 256], strides = [1, 1, 1]} : vector<3x8x256xf32> to vector<1x8x256xf32>
    %19 = vector.shape_cast %18 : vector<1x8x256xf32> to vector<8x256xf32>
    %20 = vector.shape_cast %19 : vector<8x256xf32> to vector<8x1x256xf32>
    %21 = vector.shape_cast %20 : vector<8x1x256xf32> to vector<8x1x256xf32>
    %22 = vector.broadcast %21 : vector<8x1x256xf32> to vector<8x14x256xf32>
    %c0_14 = arith.constant 0 : index
    %c0_15 = arith.constant 0 : index
    %c1 = arith.constant 1 : index
    %c0_16 = arith.constant 0 : index
    %23 = vector.load %arg6[%c0_14, %c0_15, %c1, %c0_16] : memref<1x8x16x256xf32, #tpu.memory_space<vmem>>, vector<1x8x14x256xf32>
    %24 = vector.shape_cast %23 : vector<1x8x14x256xf32> to vector<8x14x256xf32>
    %25 = vector.shape_cast %22 : vector<8x14x256xf32> to vector<1x8x14x256xf32>
    tpu.vector_store %arg6[%c0_14, %c0_15, %c1, %c0_16], %25 {strides = array<i32>} : memref<1x8x16x256xf32, #tpu.memory_space<vmem>>, vector<1x8x14x256xf32>,
    %26 = vector.extract_strided_slice %11 {offsets = [2, 0, 0], sizes = [1, 8, 256], strides = [1, 1, 1]} : vector<3x8x256xf32> to vector<1x8x256xf32>
    %27 = vector.shape_cast %26 : vector<1x8x256xf32> to vector<8x256xf32>
    %28 = vector.shape_cast %27 : vector<8x256xf32> to vector<8x1x256xf32>
    %c0_17 = arith.constant 0 : index
    %c0_18 = arith.constant 0 : index
    %c15 = arith.constant 15 : index
    %c0_19 = arith.constant 0 : index
    %29 = vector.load %arg6[%c0_17, %c0_18, %c15, %c0_19] : memref<1x8x16x256xf32, #tpu.memory_space<vmem>>, vector<1x8x1x256xf32>
    %30 = vector.shape_cast %29 : vector<1x8x1x256xf32> to vector<8x1x256xf32>
    %31 = vector.shape_cast %28 : vector<8x1x256xf32> to vector<1x8x1x256xf32>
    tpu.vector_store %arg6[%c0_17, %c0_18, %c15, %c0_19], %31 {strides = array<i32>} : memref<1x8x16x256xf32, #tpu.memory_space<vmem>>, vector<1x8x1x256xf32>,
    return
  }
  func.func @transform_0(%arg0: i32, %arg1: i32, %arg2: i32) -> (i32, i32, i32, i32) {
    %c0_i32 = arith.constant 0 : i32
    %c0_i32_0 = arith.constant 0 : i32
    return %arg0, %c0_i32, %arg1, %arg2 : i32, i32, i32, i32
  }
  func.func @transform_1(%arg0: i32, %arg1: i32, %arg2: i32) -> (i32, i32, i32) {
    %c0_i32 = arith.constant 0 : i32
    %c0_i32_0 = arith.constant 0 : i32
    %c0_i32_1 = arith.constant 0 : i32
    return %c0_i32, %arg1, %c0_i32_0 : i32, i32, i32
  }
  func.func @transform_2(%arg0: i32, %arg1: i32, %arg2: i32) -> (i32, i32, i32) {
    %c0_i32 = arith.constant 0 : i32
    %c0_i32_0 = arith.constant 0 : i32
    %c0_i32_1 = arith.constant 0 : i32
    return %c0_i32, %arg1, %c0_i32_0 : i32, i32, i32
  }
  func.func @transform_3(%arg0: i32, %arg1: i32, %arg2: i32) -> (i32, i32, i32, i32) {
    %c0_i32 = arith.constant 0 : i32
    %c0_i32_0 = arith.constant 0 : i32
    return %arg0, %arg1, %c0_i32, %arg2 : i32, i32, i32, i32
  }
}

</mosaic_0001>

<llo_original>
// kernel: squeeze.10
$region0: #{squeeze.10}
  %s0 = inlined_call_operand.vmem [shape: f32[24], index: 0, kind: input, shape index: {}]
  %s1 = inlined_call_operand.vmem [shape: f32[3,8], index: 1, kind: output, shape index: {}]
  $region1: #{squeeze.10} parent=0
    #allocation0 [shape = 'u8[4096]{0}', space=vmem, size = 0x1000, scoped, tag = 'scoped mem for output reshape']
    #allocation1 [shape = 'u8[4096]{0}', space=vmem, size = 0x1000, scoped, tag = 'scoped mem for input reshape']
    %s3 = sshll.u32 1, 1
    %s4 = ssub.s32 %s3, 1
    %v5 = vld [vmem:[%s0] sm:%s4]
    %6 = vst [vmem:[#allocation1] sm:%s4] %v5
    %v7 = vld [vmem:[#allocation1] sm:$0x1]
    %vm8 = vcmask 64512
    %9 = vst.msk [vmem:[#allocation0] sm:$0x1] %vm8, %v7
    %v10 = vld [vmem:[#allocation1] sm:$0x1]
    %11 = vrot.lane.b32.xlu0 %v10, 120
    %v12 = vpop.permute.xlu0 %11
    %vm13 = vcmask 64512
    %s14 = scalar_lea.vmem [#allocation0], 1
    %15 = vst.msk [vmem:[%s14] sm:$0x1] %vm13, %v12
    %v16 = vld [vmem:[#allocation1] sm:$0x1]
    %17 = vrot.lane.b32.xlu0 %v16, 112
    %v18 = vpop.permute.xlu0 %17
    %vm19 = vcmask 64512
    %s20 = scalar_lea.vmem [#allocation0], 2
    %21 = vst.msk [vmem:[%s20] sm:$0x1] %vm19, %v18
    %s23 = sshll.u32 1, 4
    %s24 = ssub.s32 %s23, 1
    %v26 = vld [vmem:[#allocation0] sm:%s24]
    %s27 = sshll.u32 1, 4
    %s28 = ssub.s32 %s27, 1
    %29 = vst [vmem:[%s1] sm:%s28] %v26

// kernel: mul.42
$region0: #{mul.42}
  #allocation0 [shape = 's32[1]{0}', space=sflag, size = 0x4, scoped, tag = 'scoped memory for mul.42']
  %s0 = inlined_call_operand.vmem [shape: f32[1,8,1], index: 0, kind: input, shape index: {}]
  %s1 = inlined_call_operand.vmem [shape: f32[1,8,1], index: 1, kind: input, shape index: {}]
  %s2 = inlined_call_operand.vmem [shape: f32[1,8,1], index: 2, kind: output, shape index: {}]
  %v3 = vld [vmem:[%s0] sm:$0xff]
  %v4 = vld [vmem:[%s1] sm:$0xff]
  %5 = xla_tuple %v3, %v4
  %6 = xla_tuple %5
  %v7 = vmul.f32 %v3, %v4
  %8 = xla_tuple %v7
  %9 = vst [vmem:[%s2] sm:$0xff] %v7

// kernel: skip_upsample_3d.3
$region0: #{skip_upsample_3d.3}
  #allocation0 [shape = 'u32[]', space=smem, size = 0x4, offset = 0x4, fixed_abs, tag = 'smem constant byte address 0x4 - core index']
  #allocation1 [shape = 'u32[144,128]{1,0:T(1,128)}', space=vmem, size = 0x12000, scoped, tag = 'internal scratch']
  %s0 = inlined_call_operand.vmem [shape: bf16[2,4,256], index: 0, kind: input, shape index: {}]
  %s1 = inlined_call_operand.vmem [shape: bf16[8,4], index: 1, kind: input, shape index: {}]
  %s2 = inlined_call_operand.vmem [shape: f32[8,1], index: 2, kind: input, shape index: {}]
  %s3 = inlined_call_operand.vmem [shape: f32[2,8,256], index: 3, kind: output, shape index: {}]
  %s4 = sld [smem:[#allocation0]]
  $region45: #{skip_upsample_3d.3} parent=0
    _
  %s6 = ssub.s32 1, %s4
  %s7 = scalar_select 0, %s6, %s4
  loop: start=0, step=1, limit=4
  $region2: #{skip_upsample_3d.3} parent=0 // loop_pre_header
    _
  $region3: #{skip_upsample_3d.3} parent=0 // loop_header
    %s9 = sphi 0, %s13
    %p10 = scmp.ge.s32.totalorder %s9, 4
    %s16 = sphi 0, %s28
    %s17 = sphi 0, %s24
    %s18 = sphi 0, %s16
    %s19 = sphi 0, %s17
    %s20 = sphi 0, %s18
    %s21 = sphi 0, %s19
    %s33 = sphi 0, %s35
    %s36 = sphi 0, %s33
    %s37 = sphi 0, %s36
    %s53 = sphi 0, %s37
    %s57 = sphi 0, %s57
    %s59 = sphi 0, %s57
    %s60 = sphi 0, %s59
    %s74 = sphi 0, %s60
    %s78 = sphi 0, %s78
    %s80 = sphi 0, %s78
    %s81 = sphi 0, %s80
    %s95 = sphi 0, %s81
    %s103 = sphi 0, %s105
    %s106 = sphi 0, %s103
    %s107 = sphi 0, %s106
    %s123 = sphi 0, %s107
  $region4: #{skip_upsample_3d.3} parent=0 // loop_header_branch
    %12 = sbr.rel (%p10) target = $region8
  $region5: #{skip_upsample_3d.3} parent=0 // loop_body
    %s14 = ssub.s32 %s9, 1
    %s15 = ssub.s32 %s9, 2
    %s22 = sadd.s32 1, %s17
    %p23 = scmp.ge.s32.totalorder %s22, 1
    %s24 = scalar_select %p23, 0, %s22
    %s25 = sadd.s32 1, %s16
    %s26 = scalar_select %p23, %s25, %s16
    %p27 = scmp.ge.s32.totalorder %s26, 2
    %s28 = scalar_select %p27, 0, %s26
    %s29 = ssub.s32 %s16, %s28
    %s30 = ssub.s32 %s17, %s24
    %s31 = sor.u32 %s29, %s30
    %p32 = scmp.eq.s32.totalorder %s31, 0
    %s34 = sadd.s32 %s33, 1
    %s35 = scalar_select %p32, %s33, %s34
    %p38 = pneg %p32
    %p39 = scmp.eq.s32.totalorder %s9, 1
    %p40 = por %p38, %p39
    %p41 = scmp.ne.s32.totalorder %s33, %s36
    %p42 = scmp.eq.s32.totalorder %s9, 0
    %p43 = por %p41, %p42
    %p44 = scmp.ne.s32.totalorder %s33, %s36
    %p45 = scmp.eq.s32.totalorder %s14, 1
    %p46 = por %p44, %p45
    %p47 = scmp.ne.s32.totalorder %s36, %s37
    %p48 = scmp.eq.s32.totalorder %s14, 0
    %p49 = por %p47, %p48
    %p50 = scmp.ne.s32.totalorder %s36, %s37
    %p51 = scmp.eq.s32.totalorder %s15, 1
    %p52 = por %p50, %p51
    %p54 = scmp.ne.s32.totalorder %s37, %s53
    %p55 = scmp.eq.s32.totalorder %s15, 0
    %p56 = por %p54, %p55
    %s58 = sadd.s32 %s57, 1
    %p61 = scmp.eq.s32.totalorder %s9, 1
    %p62 = scmp.ne.s32.totalorder %s57, %s59
    %p63 = scmp.eq.s32.totalorder %s9, 0
    %p64 = por %p62, %p63
    %p65 = scmp.ne.s32.totalorder %s57, %s59
    %p66 = scmp.eq.s32.totalorder %s14, 1
    %p67 = por %p65, %p66
    %p68 = scmp.ne.s32.totalorder %s59, %s60
    %p69 = scmp.eq.s32.totalorder %s14, 0
    %p70 = por %p68, %p69
    %p71 = scmp.ne.s32.totalorder %s59, %s60
    %p72 = scmp.eq.s32.totalorder %s15, 1
    %p73 = por %p71, %p72
    %p75 = scmp.ne.s32.totalorder %s60, %s74
    %p76 = scmp.eq.s32.totalorder %s15, 0
    %p77 = por %p75, %p76
    %s79 = sadd.s32 %s78, 1
    %p82 = scmp.eq.s32.totalorder %s9, 1
    %p83 = scmp.ne.s32.totalorder %s78, %s80
    %p84 = scmp.eq.s32.totalorder %s9, 0
    %p85 = por %p83, %p84
    %p86 = scmp.ne.s32.totalorder %s78, %s80
    %p87 = scmp.eq.s32.totalorder %s14, 1
    %p88 = por %p86, %p87
    %p89 = scmp.ne.s32.totalorder %s80, %s81
    %p90 = scmp.eq.s32.totalorder %s14, 0
    %p91 = por %p89, %p90
    %p92 = scmp.ne.s32.totalorder %s80, %s81
    %p93 = scmp.eq.s32.totalorder %s15, 1
    %p94 = por %p92, %p93
    %p96 = scmp.ne.s32.totalorder %s81, %s95
    %p97 = scmp.eq.s32.totalorder %s15, 0
    %p98 = por %p96, %p97
    %s99 = ssub.s32 %s16, %s28
    %s100 = ssub.s32 %s17, %s24
    %s101 = sor.u32 %s99, %s100
    %p102 = scmp.eq.s32.totalorder %s101, 0
    %s104 = sadd.s32 %s103, 1
    %s105 = scalar_select %p102, %s103, %s104
    %p108 = pneg %p102
    %p109 = scmp.eq.s32.totalorder %s9, 1
    %p110 = por %p108, %p109
    %p111 = scmp.ne.s32.totalorder %s103, %s106
    %p112 = scmp.eq.s32.totalorder %s9, 0
    %p113 = por %p111, %p112
    %p114 = scmp.ne.s32.totalorder %s103, %s106
    %p115 = scmp.eq.s32.totalorder %s14, 1
    %p116 = por %p114, %p115
    %p117 = scmp.ne.s32.totalorder %s106, %s107
    %p118 = scmp.eq.s32.totalorder %s14, 0
    %p119 = por %p117, %p118
    %p120 = scmp.ne.s32.totalorder %s106, %s107
    %p121 = scmp.eq.s32.totalorder %s15, 1
    %p122 = por %p120, %p121
    %p124 = scmp.ne.s32.totalorder %s107, %s123
    %p125 = scmp.eq.s32.totalorder %s15, 0
    %p126 = por %p124, %p125
    %p127 = scmp.le.s32.totalorder 1, %s9
    %p128 = scmp.lt.s32.totalorder %s9, 3
    %p129 = pnand %p127, %p128
    %p130 = pneg %p129
    // Predicated region
    $region9: #{skip_upsample_3d.3} parent=5 // pred_check
      _
    $region10: #{skip_upsample_3d.3} parent=5 // pred_check_branch
      %132 = sbr.rel (%p129) target = $region12
    $region11: #{skip_upsample_3d.3} parent=5 // pred_region
      %s133 = ssub.s32 %s9, 1
      // Predicated region
      $region13: #{skip_upsample_3d.3} parent=11 // pred_check
        %p134 = pneg %p70
      $region14: #{skip_upsample_3d.3} parent=11 // pred_check_branch
        %136 = sbr.rel (%p134) target = $region16
      $region15: #{skip_upsample_3d.3} parent=11 // pred_region
        _
      $region16: #{skip_upsample_3d.3} parent=11 // pred_fallthru
        _
      // Predicated region
      $region17: #{skip_upsample_3d.3} parent=11 // pred_check
        %p137 = pneg %p91
      $region18: #{skip_upsample_3d.3} parent=11 // pred_check_branch
        %139 = sbr.rel (%p137) target = $region20
      $region19: #{skip_upsample_3d.3} parent=11 // pred_region
        _
      $region20: #{skip_upsample_3d.3} parent=11 // pred_fallthru
        _
    $region12: #{skip_upsample_3d.3} parent=5 // pred_fallthru
      _
    %p140 = scmp.lt.s32.totalorder %s9, 2
    // Predicated region
    $region21: #{skip_upsample_3d.3} parent=5 // pred_check
      %p141 = pneg %p140
    $region22: #{skip_upsample_3d.3} parent=5 // pred_check_branch
      %143 = sbr.rel (%p141) target = $region24
    $region23: #{skip_upsample_3d.3} parent=5 // pred_region
      // Predicated region
      $region25: #{skip_upsample_3d.3} parent=23 // pred_check
        %p144 = pneg %p43
      $region26: #{skip_upsample_3d.3} parent=23 // pred_check_branch
        %146 = sbr.rel (%p144) target = $region28
      $region27: #{skip_upsample_3d.3} parent=23 // pred_region
        %s147 = smul.u32 2, %s17
        %p148 = scmp.lt.s32.totalorder %s16, 1
        %s149 = scalar_select %p148, %s16, 1
        %p150 = scmp.lt.s32.totalorder %s147, 1
        %s151 = scalar_select %p150, %s147, 1
        %s152 = smul.addr %s149, 2
        %s153 = sadd.s32 %s151, %s152
        %s154 = smul.addr %s153, 2
        %s155 = scalar_lea.vmem %s0, %s154
        %s156 = smul.u32 2, %s17
      $region28: #{skip_upsample_3d.3} parent=23 // pred_fallthru
        _
    $region24: #{skip_upsample_3d.3} parent=5 // pred_fallthru
      _
    %p157 = scmp.le.s32.totalorder 1, %s9
    %p158 = scmp.lt.s32.totalorder %s9, 3
    %p159 = pnand %p157, %p158
    %p160 = pneg %p159
    // Predicated region
    $region29: #{skip_upsample_3d.3} parent=5 // pred_check
      _
    $region30: #{skip_upsample_3d.3} parent=5 // pred_check_branch
      %162 = sbr.rel (%p159) target = $region32
    $region31: #{skip_upsample_3d.3} parent=5 // pred_region
      %s163 = ssub.s32 %s9, 1
      %s164 = smul.u32 2, %s19
      %p165 = scmp.lt.s32.totalorder %s18, 1
      %s166 = scalar_select %p165, %s18, 1
      %p167 = scmp.lt.s32.totalorder %s164, 1
      %s168 = scalar_select %p167, %s164, 1
      %s169 = smul.addr %s166, 2
      %s170 = sadd.s32 %s168, %s169
      %s171 = smul.addr %s170, 2
      %s172 = scalar_lea.vmem %s0, %s171
      %p173 = pneg %p49
      %p174 = pneg %p46
      %p175 = pneg %p70
      %p176 = pneg %p67
      %p177 = pneg %p91
      %p178 = pneg %p88
      %p179 = pneg %p119
      %p180 = pneg %p116
      %s181 = smul.u32 2, %s19
      %p182 = scmp.lt.s32.totalorder %s18, 1
      %s183 = scalar_select %p182, %s18, 1
      %p184 = scmp.lt.s32.totalorder %s181, 1
      %s185 = scalar_select %p184, %s181, 1
      %s186 = smul.addr %s183, 2
      %s187 = sadd.s32 %s185, %s186
      %s188 = smul.addr %s187, 8
      %s189 = scalar_lea.vmem %s3, %s188
      %s190 = smul.u32 2, %s19
      %p191 = scmp.lt.s32.totalorder %s18, 1
      %s192 = scalar_select %p191, %s18, 1
      %p193 = scmp.lt.s32.totalorder %s190, 1
      %s194 = scalar_select %p193, %s190, 1
      %s195 = smul.addr %s192, 2
      %s196 = sadd.s32 %s194, %s195
      %s197 = smul.addr %s196, 2
      %s198 = scalar_lea.vmem %s0, %s197
      %s199 = smul.u32 2, %s19
      %s200 = smul.u32 2, %s19
      %p201 = scmp.lt.s32.totalorder %s18, 1
      %s202 = scalar_select %p201, %s18, 1
      %p203 = scmp.lt.s32.totalorder %s200, 1
      %s204 = scalar_select %p203, %s200, 1
      %s205 = smul.addr %s202, 2
      %s206 = sadd.s32 %s204, %s205
      %s207 = smul.addr %s206, 8
      %s208 = scalar_lea.vmem %s3, %s207
      %s209 = smul.u32 2, %s19
      %v211 = vld [vmem:[%s1] sm:$0xf]
      %v212 = vld [vmem:[%s198] sm:$0xf]
      %v213 = vld [vmem:[%s2] sm:$0xff]
      %215 = vset.pattern.permute.xlu0 0
      %216 = vperm.xlu0 %215, %v213
      %v217 = vpop.permute.xlu0 %216
      %v221 = vunpack.c.l.s4 1983009808
      %v222 = vunpack.c.0.s8 %v221
      %v223 = vlaneseq
      %v224 = vshrl.u32 %v223, 7
      %v225 = vsub.s32 %v222, %v224
      %v226 = vrot.slane %v212, %v225
      %v227 = vcombine.high %v226, %v226
      %vm228 = vcmask 31744
      %v230 = vsel %vm228, %v211, 0
      %vm232 = vcmask 1041408
      %v234 = vsel %vm232, %v226, 0
      %v237 = vsel %vm232, %v227, 0
      %239 = vmatprep.subr.bf16.mxu0 0
      %240 = vmatpush1.bf16.msra.mxu0 0
      %241 = vmatprep.subr.bf16.mxu0 0
      %242 = vmatpush1.bf16.msra.mxu0 0
      %243 = vmatprep.subr.bf16.mxu0 0
      %244 = vmatpush1.bf16.msra.mxu0 0
      %245 = vmatprep.subr.bf16.mxu0 0
      %246 = vmatpush1.bf16.msra.mxu0 0
      %247 = vmatprep.subr.bf16.mxu0 0
      %248 = vmatpush1.bf16.msra.mxu0 0
      %249 = vmatprep.subr.bf16.mxu0 0
      %250 = vmatpush1.bf16.msra.mxu0 0
      %251 = vmatprep.subr.bf16.mxu0 0
      %252 = vmatpush1.bf16.msra.mxu0 0
      %253 = vmatprep.subr.bf16.mxu0 %v237
      %254 = vmatpush1.bf16.msra.mxu0 %v234
      %255 = vmatprep.subr.bf16.mxu0 0
      %256 = vmatpush2.bf16.msra.mxu0 0
      %257 = vmatprep.subr.bf16.mxu0 0
      %258 = vmatpush2.bf16.msra.mxu0 0
      %259 = vmatprep.subr.bf16.mxu0 0
      %260 = vmatpush2.bf16.msra.mxu0 0
      %261 = vmatprep.subr.bf16.mxu0 0
      %262 = vmatpush2.bf16.msra.mxu0 0
      %263 = vmatprep.subr.bf16.mxu0 0
      %264 = vmatpush2.bf16.msra.mxu0 0
      %265 = vmatprep.subr.bf16.mxu0 0
      %266 = vmatpush2.bf16.msra.mxu0 0
      %267 = vmatprep.subr.bf16.mxu0 0
      %268 = vmatpush2.bf16.msra.mxu0 0
      %269 = vmatprep.subr.bf16.mxu0 0
      %270 = vmatpush2.bf16.msra.mxu0 0
      %271 = vmatprep.mubr.bf16.mxu0 0
      %272 = vmatmul.mubr.bf16.gmra.mxu0 %v230
      %v273 = vpop.f32.mrf.mxu0
      %v274 = vadd.f32 %v217, %v273
      %v275 = vpop.f32.mrf.mxu0
      %v276 = vadd.f32 %v217, %v275
      %v277 = vpop.f32.mrf.mxu0
      %v278 = vpop.f32.mrf.mxu0
      %279 = vdwg.mxu0
      %v280 = vmax.f32 %v274, 0.0
      %v281 = vmax.f32 %v276, 0.0
      %v282 = vmin.f32 %v280, 6.0
      %v283 = vmin.f32 %v281, 6.0
      %284 = vst [vmem:[%s208] sm:$0xff] %v282
      %285 = vst [vmem:[%s208 + $0x8] sm:$0xff] %v283
      %s286 = smul.u32 2, %s19
      %p287 = scmp.lt.s32.totalorder %s18, 1
      %s288 = scalar_select %p287, %s18, 1
      %p289 = scmp.lt.s32.totalorder %s286, 1
      %s290 = scalar_select %p289, %s286, 1
      %s291 = smul.addr %s288, 2
      %s292 = sadd.s32 %s290, %s291
      %s293 = smul.addr %s292, 8
      %s294 = scalar_lea.vmem %s3, %s293
      // Predicated region
      $region33: #{skip_upsample_3d.3} parent=31 // pred_check
        %p295 = pneg %p116
      $region34: #{skip_upsample_3d.3} parent=31 // pred_check_branch
        %297 = sbr.rel (%p295) target = $region36
      $region35: #{skip_upsample_3d.3} parent=31 // pred_region
        %s298 = smul.u32 2, %s19
      $region36: #{skip_upsample_3d.3} parent=31 // pred_fallthru
        _
    $region32: #{skip_upsample_3d.3} parent=5 // pred_fallthru
      _
    %p299 = scmp.le.s32.totalorder 2, %s9
    // Predicated region
    $region37: #{skip_upsample_3d.3} parent=5 // pred_check
      %p300 = pneg %p299
    $region38: #{skip_upsample_3d.3} parent=5 // pred_check_branch
      %302 = sbr.rel (%p300) target = $region40
    $region39: #{skip_upsample_3d.3} parent=5 // pred_region
      %s303 = ssub.s32 %s9, 2
      // Predicated region
      $region41: #{skip_upsample_3d.3} parent=39 // pred_check
        %p304 = pneg %p122
      $region42: #{skip_upsample_3d.3} parent=39 // pred_check_branch
        %306 = sbr.rel (%p304) target = $region44
      $region43: #{skip_upsample_3d.3} parent=39 // pred_region
        %s307 = smul.u32 2, %s21
        %p308 = scmp.lt.s32.totalorder %s20, 1
        %s309 = scalar_select %p308, %s20, 1
        %p310 = scmp.lt.s32.totalorder %s307, 1
        %s311 = scalar_select %p310, %s307, 1
        %s312 = smul.addr %s309, 2
        %s313 = sadd.s32 %s311, %s312
        %s314 = smul.addr %s313, 8
        %s315 = scalar_lea.vmem %s3, %s314
      $region44: #{skip_upsample_3d.3} parent=39 // pred_fallthru
        _
    $region40: #{skip_upsample_3d.3} parent=5 // pred_fallthru
      _
  $region6: #{skip_upsample_3d.3} parent=0 // loop_footer
    %s13 = sadd.s32 1, %s9
  $region7: #{skip_upsample_3d.3} parent=0 // loop_footer_branch
    %8 = sbr.rel target = $region3
  $region8: #{skip_upsample_3d.3} parent=0 // loop_exit
    _

// kernel: skip_upsample_3d.4
$region0: #{skip_upsample_3d.4}
  #allocation0 [shape = 'u32[]', space=smem, size = 0x4, offset = 0x4, fixed_abs, tag = 'smem constant byte address 0x4 - core index']
  #allocation1 [shape = 'u32[144,128]{1,0:T(1,128)}', space=vmem, size = 0x12000, scoped, tag = 'internal scratch']
  %s0 = inlined_call_operand.vmem [shape: bf16[2,72,256], index: 0, kind: input, shape index: {}]
  %s1 = inlined_call_operand.vmem [shape: bf16[24,72], index: 1, kind: input, shape index: {}]
  %s2 = inlined_call_operand.vmem [shape: f32[2,24,256], index: 2, kind: output, shape index: {0}]
  %s3 = inlined_call_operand.vmem [shape: f32[2,1,24,1], index: 3, kind: output, shape index: {1}]
  %s4 = inlined_call_operand.vmem [shape: f32[2,1,24,1], index: 4, kind: output, shape index: {2}]
  %5 = xla_tuple %s2, %s3, %s4
  %s6 = sld [smem:[#allocation0]]
  $region57: #{skip_upsample_3d.4} parent=0
    _
  %s8 = ssub.s32 1, %s6
  %s9 = scalar_select 0, %s8, %s6
  loop: start=0, step=1, limit=4
  $region2: #{skip_upsample_3d.4} parent=0 // loop_pre_header
    _
  $region3: #{skip_upsample_3d.4} parent=0 // loop_header
    %s11 = sphi 0, %s15
    %p12 = scmp.ge.s32.totalorder %s11, 4
    %s18 = sphi 0, %s30
    %s19 = sphi 0, %s26
    %s20 = sphi 0, %s18
    %s21 = sphi 0, %s19
    %s22 = sphi 0, %s20
    %s23 = sphi 0, %s21
    %s35 = sphi 0, %s37
    %s38 = sphi 0, %s35
    %s39 = sphi 0, %s38
    %s55 = sphi 0, %s39
    %s59 = sphi 0, %s59
    %s61 = sphi 0, %s59
    %s62 = sphi 0, %s61
    %s76 = sphi 0, %s62
    %s84 = sphi 0, %s86
    %s87 = sphi 0, %s84
    %s88 = sphi 0, %s87
    %s104 = sphi 0, %s88
    %s112 = sphi 0, %s114
    %s115 = sphi 0, %s112
    %s116 = sphi 0, %s115
    %s132 = sphi 0, %s116
    %s140 = sphi 0, %s142
    %s143 = sphi 0, %s140
    %s144 = sphi 0, %s143
    %s160 = sphi 0, %s144
  $region4: #{skip_upsample_3d.4} parent=0 // loop_header_branch
    %14 = sbr.rel (%p12) target = $region8
  $region5: #{skip_upsample_3d.4} parent=0 // loop_body
    %s16 = ssub.s32 %s11, 1
    %s17 = ssub.s32 %s11, 2
    %s24 = sadd.s32 1, %s19
    %p25 = scmp.ge.s32.totalorder %s24, 1
    %s26 = scalar_select %p25, 0, %s24
    %s27 = sadd.s32 1, %s18
    %s28 = scalar_select %p25, %s27, %s18
    %p29 = scmp.ge.s32.totalorder %s28, 2
    %s30 = scalar_select %p29, 0, %s28
    %s31 = ssub.s32 %s18, %s30
    %s32 = ssub.s32 %s19, %s26
    %s33 = sor.u32 %s31, %s32
    %p34 = scmp.eq.s32.totalorder %s33, 0
    %s36 = sadd.s32 %s35, 1
    %s37 = scalar_select %p34, %s35, %s36
    %p40 = pneg %p34
    %p41 = scmp.eq.s32.totalorder %s11, 1
    %p42 = por %p40, %p41
    %p43 = scmp.ne.s32.totalorder %s35, %s38
    %p44 = scmp.eq.s32.totalorder %s11, 0
    %p45 = por %p43, %p44
    %p46 = scmp.ne.s32.totalorder %s35, %s38
    %p47 = scmp.eq.s32.totalorder %s16, 1
    %p48 = por %p46, %p47
    %p49 = scmp.ne.s32.totalorder %s38, %s39
    %p50 = scmp.eq.s32.totalorder %s16, 0
    %p51 = por %p49, %p50
    %p52 = scmp.ne.s32.totalorder %s38, %s39
    %p53 = scmp.eq.s32.totalorder %s17, 1
    %p54 = por %p52, %p53
    %p56 = scmp.ne.s32.totalorder %s39, %s55
    %p57 = scmp.eq.s32.totalorder %s17, 0
    %p58 = por %p56, %p57
    %s60 = sadd.s32 %s59, 1
    %p63 = scmp.eq.s32.totalorder %s11, 1
    %p64 = scmp.ne.s32.totalorder %s59, %s61
    %p65 = scmp.eq.s32.totalorder %s11, 0
    %p66 = por %p64, %p65
    %p67 = scmp.ne.s32.totalorder %s59, %s61
    %p68 = scmp.eq.s32.totalorder %s16, 1
    %p69 = por %p67, %p68
    %p70 = scmp.ne.s32.totalorder %s61, %s62
    %p71 = scmp.eq.s32.totalorder %s16, 0
    %p72 = por %p70, %p71
    %p73 = scmp.ne.s32.totalorder %s61, %s62
    %p74 = scmp.eq.s32.totalorder %s17, 1
    %p75 = por %p73, %p74
    %p77 = scmp.ne.s32.totalorder %s62, %s76
    %p78 = scmp.eq.s32.totalorder %s17, 0
    %p79 = por %p77, %p78
    %s80 = ssub.s32 %s18, %s30
    %s81 = ssub.s32 %s19, %s26
    %s82 = sor.u32 %s80, %s81
    %p83 = scmp.eq.s32.totalorder %s82, 0
    %s85 = sadd.s32 %s84, 1
    %s86 = scalar_select %p83, %s84, %s85
    %p89 = pneg %p83
    %p90 = scmp.eq.s32.totalorder %s11, 1
    %p91 = por %p89, %p90
    %p92 = scmp.ne.s32.totalorder %s84, %s87
    %p93 = scmp.eq.s32.totalorder %s11, 0
    %p94 = por %p92, %p93
    %p95 = scmp.ne.s32.totalorder %s84, %s87
    %p96 = scmp.eq.s32.totalorder %s16, 1
    %p97 = por %p95, %p96
    %p98 = scmp.ne.s32.totalorder %s87, %s88
    %p99 = scmp.eq.s32.totalorder %s16, 0
    %p100 = por %p98, %p99
    %p101 = scmp.ne.s32.totalorder %s87, %s88
    %p102 = scmp.eq.s32.totalorder %s17, 1
    %p103 = por %p101, %p102
    %p105 = scmp.ne.s32.totalorder %s88, %s104
    %p106 = scmp.eq.s32.totalorder %s17, 0
    %p107 = por %p105, %p106
    %s108 = ssub.s32 %s18, %s30
    %s109 = ssub.s32 %s19, %s26
    %s110 = sor.u32 %s108, %s109
    %p111 = scmp.eq.s32.totalorder %s110, 0
    %s113 = sadd.s32 %s112, 1
    %s114 = scalar_select %p111, %s112, %s113
    %p117 = pneg %p111
    %p118 = scmp.eq.s32.totalorder %s11, 1
    %p119 = por %p117, %p118
    %p120 = scmp.ne.s32.totalorder %s112, %s115
    %p121 = scmp.eq.s32.totalorder %s11, 0
    %p122 = por %p120, %p121
    %p123 = scmp.ne.s32.totalorder %s112, %s115
    %p124 = scmp.eq.s32.totalorder %s16, 1
    %p125 = por %p123, %p124
    %p126 = scmp.ne.s32.totalorder %s115, %s116
    %p127 = scmp.eq.s32.totalorder %s16, 0
    %p128 = por %p126, %p127
    %p129 = scmp.ne.s32.totalorder %s115, %s116
    %p130 = scmp.eq.s32.totalorder %s17, 1
    %p131 = por %p129, %p130
    %p133 = scmp.ne.s32.totalorder %s116, %s132
    %p134 = scmp.eq.s32.totalorder %s17, 0
    %p135 = por %p133, %p134
    %s136 = ssub.s32 %s18, %s30
    %s137 = ssub.s32 %s19, %s26
    %s138 = sor.u32 %s136, %s137
    %p139 = scmp.eq.s32.totalorder %s138, 0
    %s141 = sadd.s32 %s140, 1
    %s142 = scalar_select %p139, %s140, %s141
    %p145 = pneg %p139
    %p146 = scmp.eq.s32.totalorder %s11, 1
    %p147 = por %p145, %p146
    %p148 = scmp.ne.s32.totalorder %s140, %s143
    %p149 = scmp.eq.s32.totalorder %s11, 0
    %p150 = por %p148, %p149
    %p151 = scmp.ne.s32.totalorder %s140, %s143
    %p152 = scmp.eq.s32.totalorder %s16, 1
    %p153 = por %p151, %p152
    %p154 = scmp.ne.s32.totalorder %s143, %s144
    %p155 = scmp.eq.s32.totalorder %s16, 0
    %p156 = por %p154, %p155
    %p157 = scmp.ne.s32.totalorder %s143, %s144
    %p158 = scmp.eq.s32.totalorder %s17, 1
    %p159 = por %p157, %p158
    %p161 = scmp.ne.s32.totalorder %s144, %s160
    %p162 = scmp.eq.s32.totalorder %s17, 0
    %p163 = por %p161, %p162
    %p164 = scmp.le.s32.totalorder 1, %s11
    %p165 = scmp.lt.s32.totalorder %s11, 3
    %p166 = pnand %p164, %p165
    %p167 = pneg %p166
    // Predicated region
    $region9: #{skip_upsample_3d.4} parent=5 // pred_check
      _
    $region10: #{skip_upsample_3d.4} parent=5 // pred_check_branch
      %169 = sbr.rel (%p166) target = $region12
    $region11: #{skip_upsample_3d.4} parent=5 // pred_region
      %s170 = ssub.s32 %s11, 1
      // Predicated region
      $region13: #{skip_upsample_3d.4} parent=11 // pred_check
        %p171 = pneg %p72
      $region14: #{skip_upsample_3d.4} parent=11 // pred_check_branch
        %173 = sbr.rel (%p171) target = $region16
      $region15: #{skip_upsample_3d.4} parent=11 // pred_region
        _
      $region16: #{skip_upsample_3d.4} parent=11 // pred_fallthru
        _
    $region12: #{skip_upsample_3d.4} parent=5 // pred_fallthru
      _
    %p174 = scmp.lt.s32.totalorder %s11, 2
    // Predicated region
    $region17: #{skip_upsample_3d.4} parent=5 // pred_check
      %p175 = pneg %p174
    $region18: #{skip_upsample_3d.4} parent=5 // pred_check_branch
      %177 = sbr.rel (%p175) target = $region20
    $region19: #{skip_upsample_3d.4} parent=5 // pred_region
      // Predicated region
      $region21: #{skip_upsample_3d.4} parent=19 // pred_check
        %p178 = pneg %p45
      $region22: #{skip_upsample_3d.4} parent=19 // pred_check_branch
        %180 = sbr.rel (%p178) target = $region24
      $region23: #{skip_upsample_3d.4} parent=19 // pred_region
        %s181 = smul.u32 2, %s19
        %p182 = scmp.lt.s32.totalorder %s18, 1
        %s183 = scalar_select %p182, %s18, 1
        %p184 = scmp.lt.s32.totalorder %s181, 1
        %s185 = scalar_select %p184, %s181, 1
        %s186 = smul.addr %s183, 18
        %s187 = sadd.s32 %s185, %s186
        %s188 = smul.addr %s187, 4
        %s189 = scalar_lea.vmem %s0, %s188
        %s190 = smul.u32 2, %s19
      $region24: #{skip_upsample_3d.4} parent=19 // pred_fallthru
        _
    $region20: #{skip_upsample_3d.4} parent=5 // pred_fallthru
      _
    %p191 = scmp.le.s32.totalorder 1, %s11
    %p192 = scmp.lt.s32.totalorder %s11, 3
    %p193 = pnand %p191, %p192
    %p194 = pneg %p193
    // Predicated region
    $region25: #{skip_upsample_3d.4} parent=5 // pred_check
      _
    $region26: #{skip_upsample_3d.4} parent=5 // pred_check_branch
      %196 = sbr.rel (%p193) target = $region28
    $region27: #{skip_upsample_3d.4} parent=5 // pred_region
      %s197 = ssub.s32 %s11, 1
      %s198 = smul.u32 2, %s21
      %p199 = scmp.lt.s32.totalorder %s20, 1
      %s200 = scalar_select %p199, %s20, 1
      %p201 = scmp.lt.s32.totalorder %s198, 1
      %s202 = scalar_select %p201, %s198, 1
      %s203 = smul.addr %s200, 18
      %s204 = sadd.s32 %s202, %s203
      %s205 = smul.addr %s204, 4
      %s206 = scalar_lea.vmem %s0, %s205
      %p207 = pneg %p51
      %p208 = pneg %p48
      %p209 = pneg %p72
      %p210 = pneg %p69
      %p211 = pneg %p100
      %p212 = pneg %p97
      %s213 = smul.u32 2, %s21
      %p214 = scmp.lt.s32.totalorder %s20, 1
      %s215 = scalar_select %p214, %s20, 1
      %p216 = scmp.lt.s32.totalorder %s213, 1
      %s217 = scalar_select %p216, %s213, 1
      %s218 = smul.addr %s215, 6
      %s219 = sadd.s32 %s217, %s218
      %s220 = smul.addr %s219, 8
      %s221 = scalar_lea.vmem %s2, %s220
      %p222 = pneg %p128
      %p223 = pneg %p125
      %p224 = scmp.lt.s32.totalorder %s20, 1
      %s225 = scalar_select %p224, %s20, 1
      %p226 = scmp.lt.s32.totalorder %s21, 0
      %s227 = scalar_select %p226, %s21, 0
      %s228 = smul.addr %s227, 3
      %s229 = smul.addr %s225, 3
      %s230 = sadd.s32 %s228, %s229
      %s231 = smul.addr %s230, 8
      %s232 = scalar_lea.vmem %s3, %s231
      %p233 = pneg %p156
      %p234 = pneg %p153
      %p235 = scmp.lt.s32.totalorder %s20, 1
      %s236 = scalar_select %p235, %s20, 1
      %p237 = scmp.lt.s32.totalorder %s21, 0
      %s238 = scalar_select %p237, %s21, 0
      %s239 = smul.addr %s238, 3
      %s240 = smul.addr %s236, 3
      %s241 = sadd.s32 %s239, %s240
      %s242 = smul.addr %s241, 8
      %s243 = scalar_lea.vmem %s4, %s242
      %s244 = smul.u32 2, %s21
      %p245 = scmp.lt.s32.totalorder %s20, 1
      %s246 = scalar_select %p245, %s20, 1
      %p247 = scmp.lt.s32.totalorder %s244, 1
      %s248 = scalar_select %p247, %s244, 1
      %s249 = smul.addr %s246, 18
      %s250 = sadd.s32 %s248, %s249
      %s251 = smul.addr %s250, 4
      %s252 = scalar_lea.vmem %s0, %s251
      %s253 = smul.u32 2, %s21
      %s254 = smul.u32 2, %s21
      %p255 = scmp.lt.s32.totalorder %s20, 1
      %s256 = scalar_select %p255, %s20, 1
      %p257 = scmp.lt.s32.totalorder %s254, 1
      %s258 = scalar_select %p257, %s254, 1
      %s259 = smul.addr %s256, 6
      %s260 = sadd.s32 %s258, %s259
      %s261 = smul.addr %s260, 8
      %s262 = scalar_lea.vmem %s2, %s261
      %s263 = smul.u32 2, %s21
      %p264 = scmp.lt.s32.totalorder %s20, 1
      %s265 = scalar_select %p264, %s20, 1
      %p266 = scmp.lt.s32.totalorder %s21, 0
      %s267 = scalar_select %p266, %s21, 0
      %s268 = smul.addr %s267, 3
      %s269 = smul.addr %s265, 3
      %s270 = sadd.s32 %s268, %s269
      %s271 = smul.addr %s270, 8
      %s272 = scalar_lea.vmem %s3, %s271
      %p273 = scmp.lt.s32.totalorder %s20, 1
      %s274 = scalar_select %p273, %s20, 1
      %p275 = scmp.lt.s32.totalorder %s21, 0
      %s276 = scalar_select %p275, %s21, 0
      %s277 = smul.addr %s276, 3
      %s278 = smul.addr %s274, 3
      %s279 = sadd.s32 %s277, %s278
      %s280 = smul.addr %s279, 8
      %s281 = scalar_lea.vmem %s4, %s280
      %v283 = vld [vmem:[%s1] sm:$0xf]
      %v284 = vld [vmem:[%s1 + $0x4] sm:$0xf]
      %v285 = vld [vmem:[%s1 + $0x8] sm:$0xf]
      %v286 = vld [vmem:[%s252] sm:$0xff]
      %v287 = vld [vmem:[%s252 + $0x8] sm:$0xff]
      %v288 = vld [vmem:[%s252 + $0x10] sm:$0xff]
      %v289 = vld [vmem:[%s252 + $0x18] sm:$0xff]
      %v290 = vld [vmem:[%s252 + $0x20] sm:$0xff]
      %v291 = vld [vmem:[%s252 + $0x28] sm:$0xff]
      %v292 = vld [vmem:[%s252 + $0x30] sm:$0xff]
      %v293 = vld [vmem:[%s252 + $0x38] sm:$0xff]
      %v294 = vld [vmem:[%s252 + $0x40] sm:$0xff]
      %v298 = vunpack.c.l.b16 %v283
      %v299 = vunpack.c.l.b16 %v284
      %v300 = vunpack.c.l.b16 %v285
      %v301 = vpack.c.b16 %v299, %v298
      %v302 = vpack.c.b16 %v300, %v300
      %v312 = vunpack.c.l.b16 %v286
      %v313 = vunpack.c.h.b16 %v286
      %v314 = vunpack.c.l.b16 %v287
      %v315 = vunpack.c.h.b16 %v287
      %v316 = vunpack.c.l.b16 %v288
      %v317 = vunpack.c.h.b16 %v288
      %v318 = vunpack.c.l.b16 %v289
      %v319 = vunpack.c.h.b16 %v289
      %v320 = vunpack.c.l.b16 %v290
      %v321 = vunpack.c.h.b16 %v290
      %v322 = vunpack.c.l.b16 %v291
      %v323 = vunpack.c.h.b16 %v291
      %v324 = vunpack.c.l.b16 %v292
      %v325 = vunpack.c.h.b16 %v292
      %v326 = vunpack.c.l.b16 %v293
      %v327 = vunpack.c.h.b16 %v293
      %v328 = vunpack.c.l.b16 %v294
      %v329 = vunpack.c.h.b16 %v294
      %v330 = vpack.c.b16 %v314, %v312
      %v331 = vpack.c.b16 %v315, %v313
      %v332 = vpack.c.b16 %v318, %v316
      %v333 = vpack.c.b16 %v319, %v317
      %v334 = vpack.c.b16 %v322, %v320
      %v335 = vpack.c.b16 %v323, %v321
      %v336 = vpack.c.b16 %v326, %v324
      %v337 = vpack.c.b16 %v327, %v325
      %v338 = vpack.c.b16 %v328, %v328
      %v339 = vpack.c.b16 %v329, %v329
      %vm348 = vcmask 588800
      %v350 = vsel %vm348, %v301, 0
      %v353 = vsel %vm348, %v302, 0
      %vm355 = vcmask 1043456
      %v357 = vsel %vm355, %v338, 0
      %v360 = vsel %vm355, %v339, 0
      %362 = vmatprep.subr.bf16.mxu0 0
      %363 = vmatpush1.bf16.msra.mxu0 0
      %364 = vmatprep.subr.bf16.mxu0 0
      %365 = vmatpush1.bf16.msra.mxu0 0
      %366 = vmatprep.subr.bf16.mxu0 0
      %367 = vmatpush1.bf16.msra.mxu0 0
      %368 = vmatprep.subr.bf16.mxu0 %v360
      %369 = vmatpush1.bf16.msra.mxu0 %v357
      %370 = vmatprep.subr.bf16.mxu0 %v337
      %371 = vmatpush1.bf16.msra.mxu0 %v336
      %372 = vmatprep.subr.bf16.mxu0 %v335
      %373 = vmatpush1.bf16.msra.mxu0 %v334
      %374 = vmatprep.subr.bf16.mxu0 %v333
      %375 = vmatpush1.bf16.msra.mxu0 %v332
      %376 = vmatprep.subr.bf16.mxu0 %v331
      %377 = vmatpush1.bf16.msra.mxu0 %v330
      %378 = vmatprep.subr.bf16.mxu0 0
      %379 = vmatpush2.bf16.msra.mxu0 0
      %380 = vmatprep.subr.bf16.mxu0 0
      %381 = vmatpush2.bf16.msra.mxu0 0
      %382 = vmatprep.subr.bf16.mxu0 0
      %383 = vmatpush2.bf16.msra.mxu0 0
      %384 = vmatprep.subr.bf16.mxu0 0
      %385 = vmatpush2.bf16.msra.mxu0 0
      %386 = vmatprep.subr.bf16.mxu0 0
      %387 = vmatpush2.bf16.msra.mxu0 0
      %388 = vmatprep.subr.bf16.mxu0 0
      %389 = vmatpush2.bf16.msra.mxu0 0
      %390 = vmatprep.subr.bf16.mxu0 0
      %391 = vmatpush2.bf16.msra.mxu0 0
      %392 = vmatprep.subr.bf16.mxu0 0
      %393 = vmatpush2.bf16.msra.mxu0 0
      %394 = vmatprep.mubr.bf16.mxu0 0
      %395 = vmatmul.mubr.bf16.gmra.mxu0 %v350
      %v396 = vpop.f32.mrf.mxu0
      %v397 = vadd.f32 0.0, %v396
      %v398 = vpop.f32.mrf.mxu0
      %v399 = vadd.f32 0.0, %v398
      %v400 = vpop.f32.mrf.mxu0
      %v401 = vadd.f32 0.0, %v400
      %v402 = vpop.f32.mrf.mxu0
      %v403 = vadd.f32 0.0, %v402
      %404 = vmatprep.mubr.bf16.mxu0 0
      %405 = vmatmul.mubr.bf16.gmra.mxu0 %v353
      %v406 = vpop.f32.mrf.mxu0
      %v407 = vadd.f32 0.0, %v406
      %v408 = vpop.f32.mrf.mxu0
      %v409 = vadd.f32 0.0, %v408
      %v410 = vpop.f32.mrf.mxu0
      %v411 = vpop.f32.mrf.mxu0
      %412 = vdwg.mxu0
      %413 = vst [vmem:[%s262] sm:$0xff] %v397
      %414 = vst [vmem:[%s262 + $0x8] sm:$0xff] %v399
      %415 = vst [vmem:[%s262 + $0x10] sm:$0xff] %v401
      %416 = vst [vmem:[%s262 + $0x18] sm:$0xff] %v403
      %417 = vst [vmem:[%s262 + $0x20] sm:$0xff] %v407
      %418 = vst [vmem:[%s262 + $0x28] sm:$0xff] %v409
      %v419 = vadd.f32 %v397, %v399
      %420 = vadd.xlane.f32.xlu0 %v419
      %v421 = vpop.xlane.xlu0 %420
      %v422 = vadd.f32 %v401, %v403
      %423 = vadd.xlane.f32.xlu0 %v422
      %v424 = vpop.xlane.xlu0 %423
      %v425 = vadd.f32 %v407, %v409
      %426 = vadd.xlane.f32.xlu0 %v425
      %v427 = vpop.xlane.xlu0 %426
      %vm428 = vcmask 7168
      %429 = vst.msk [vmem:[%s272] sm:$0xff] %vm428, %v421
      %430 = vst.msk [vmem:[%s272 + $0x8] sm:$0xff] %vm428, %v424
      %431 = vst.msk [vmem:[%s272 + $0x10] sm:$0xff] %vm428, %v427
      %v432 = vmul.f32 %v397, %v397
      %v433 = vmul.f32 %v399, %v399
      %v434 = vmul.f32 %v401, %v401
      %v435 = vmul.f32 %v403, %v403
      %v436 = vmul.f32 %v407, %v407
      %v437 = vmul.f32 %v409, %v409
      %v438 = vadd.f32 %v432, %v433
      %439 = vadd.xlane.f32.xlu0 %v438
      %v440 = vpop.xlane.xlu0 %439
      %v441 = vadd.f32 %v434, %v435
      %442 = vadd.xlane.f32.xlu0 %v441
      %v443 = vpop.xlane.xlu0 %442
      %v444 = vadd.f32 %v436, %v437
      %445 = vadd.xlane.f32.xlu0 %v444
      %v446 = vpop.xlane.xlu0 %445
      %447 = vst.msk [vmem:[%s281] sm:$0xff] %vm428, %v440
      %448 = vst.msk [vmem:[%s281 + $0x8] sm:$0xff] %vm428, %v443
      %449 = vst.msk [vmem:[%s281 + $0x10] sm:$0xff] %vm428, %v446
      %s450 = smul.u32 2, %s21
      %p451 = scmp.lt.s32.totalorder %s20, 1
      %s452 = scalar_select %p451, %s20, 1
      %p453 = scmp.lt.s32.totalorder %s450, 1
      %s454 = scalar_select %p453, %s450, 1
      %s455 = smul.addr %s452, 6
      %s456 = sadd.s32 %s454, %s455
      %s457 = smul.addr %s456, 8
      %s458 = scalar_lea.vmem %s2, %s457
      %p459 = scmp.lt.s32.totalorder %s20, 1
      %s460 = scalar_select %p459, %s20, 1
      %p461 = scmp.lt.s32.totalorder %s21, 0
      %s462 = scalar_select %p461, %s21, 0
      %s463 = smul.addr %s462, 3
      %s464 = smul.addr %s460, 3
      %s465 = sadd.s32 %s463, %s464
      %s466 = smul.addr %s465, 8
      %s467 = scalar_lea.vmem %s3, %s466
      %p468 = scmp.lt.s32.totalorder %s20, 1
      %s469 = scalar_select %p468, %s20, 1
      %p470 = scmp.lt.s32.totalorder %s21, 0
      %s471 = scalar_select %p470, %s21, 0
      %s472 = smul.addr %s471, 3
      %s473 = smul.addr %s469, 3
      %s474 = sadd.s32 %s472, %s473
      %s475 = smul.addr %s474, 8
      %s476 = scalar_lea.vmem %s4, %s475
      // Predicated region
      $region29: #{skip_upsample_3d.4} parent=27 // pred_check
        %p477 = pneg %p97
      $region30: #{skip_upsample_3d.4} parent=27 // pred_check_branch
        %479 = sbr.rel (%p477) target = $region32
      $region31: #{skip_upsample_3d.4} parent=27 // pred_region
        %s480 = smul.u32 2, %s21
      $region32: #{skip_upsample_3d.4} parent=27 // pred_fallthru
        _
      // Predicated region
      $region33: #{skip_upsample_3d.4} parent=27 // pred_check
        %p481 = pneg %p125
      $region34: #{skip_upsample_3d.4} parent=27 // pred_check_branch
        %483 = sbr.rel (%p481) target = $region36
      $region35: #{skip_upsample_3d.4} parent=27 // pred_region
        _
      $region36: #{skip_upsample_3d.4} parent=27 // pred_fallthru
        _
      // Predicated region
      $region37: #{skip_upsample_3d.4} parent=27 // pred_check
        %p484 = pneg %p153
      $region38: #{skip_upsample_3d.4} parent=27 // pred_check_branch
        %486 = sbr.rel (%p484) target = $region40
      $region39: #{skip_upsample_3d.4} parent=27 // pred_region
        _
      $region40: #{skip_upsample_3d.4} parent=27 // pred_fallthru
        _
    $region28: #{skip_upsample_3d.4} parent=5 // pred_fallthru
      _
    %p487 = scmp.le.s32.totalorder 2, %s11
    // Predicated region
    $region41: #{skip_upsample_3d.4} parent=5 // pred_check
      %p488 = pneg %p487
    $region42: #{skip_upsample_3d.4} parent=5 // pred_check_branch
      %490 = sbr.rel (%p488) target = $region44
    $region43: #{skip_upsample_3d.4} parent=5 // pred_region
      %s491 = ssub.s32 %s11, 2
      // Predicated region
      $region45: #{skip_upsample_3d.4} parent=43 // pred_check
        %p492 = pneg %p103
      $region46: #{skip_upsample_3d.4} parent=43 // pred_check_branch
        %494 = sbr.rel (%p492) target = $region48
      $region47: #{skip_upsample_3d.4} parent=43 // pred_region
        %s495 = smul.u32 2, %s23
        %p496 = scmp.lt.s32.totalorder %s22, 1
        %s497 = scalar_select %p496, %s22, 1
        %p498 = scmp.lt.s32.totalorder %s495, 1
        %s499 = scalar_select %p498, %s495, 1
        %s500 = smul.addr %s497, 6
        %s501 = sadd.s32 %s499, %s500
        %s502 = smul.addr %s501, 8
        %s503 = scalar_lea.vmem %s2, %s502
      $region48: #{skip_upsample_3d.4} parent=43 // pred_fallthru
        _
      // Predicated region
      $region49: #{skip_upsample_3d.4} parent=43 // pred_check
        %p504 = pneg %p131
      $region50: #{skip_upsample_3d.4} parent=43 // pred_check_branch
        %506 = sbr.rel (%p504) target = $region52
      $region51: #{skip_upsample_3d.4} parent=43 // pred_region
        %p507 = scmp.lt.s32.totalorder %s22, 1
        %s508 = scalar_select %p507, %s22, 1
        %p509 = scmp.lt.s32.totalorder %s23, 0
        %s510 = scalar_select %p509, %s23, 0
        %s511 = smul.addr %s510, 3
        %s512 = smul.addr %s508, 3
        %s513 = sadd.s32 %s511, %s512
        %s514 = smul.addr %s513, 8
        %s515 = scalar_lea.vmem %s3, %s514
      $region52: #{skip_upsample_3d.4} parent=43 // pred_fallthru
        _
      // Predicated region
      $region53: #{skip_upsample_3d.4} parent=43 // pred_check
        %p516 = pneg %p159
      $region54: #{skip_upsample_3d.4} parent=43 // pred_check_branch
        %518 = sbr.rel (%p516) target = $region56
      $region55: #{skip_upsample_3d.4} parent=43 // pred_region
        %p519 = scmp.lt.s32.totalorder %s22, 1
        %s520 = scalar_select %p519, %s22, 1
        %p521 = scmp.lt.s32.totalorder %s23, 0
        %s522 = scalar_select %p521, %s23, 0
        %s523 = smul.addr %s522, 3
        %s524 = smul.addr %s520, 3
        %s525 = sadd.s32 %s523, %s524
        %s526 = smul.addr %s525, 8
        %s527 = scalar_lea.vmem %s4, %s526
      $region56: #{skip_upsample_3d.4} parent=43 // pred_fallthru
        _
    $region44: #{skip_upsample_3d.4} parent=5 // pred_fallthru
      _
  $region6: #{skip_upsample_3d.4} parent=0 // loop_footer
    %s15 = sadd.s32 1, %s11
  $region7: #{skip_upsample_3d.4} parent=0 // loop_footer_branch
    %10 = sbr.rel target = $region3
  $region8: #{skip_upsample_3d.4} parent=0 // loop_exit
    _

// kernel: skip_upsample_3d.5
$region0: #{skip_upsample_3d.5}
  #allocation0 [shape = 'u32[]', space=smem, size = 0x4, offset = 0x4, fixed_abs, tag = 'smem constant byte address 0x4 - core index']
  #allocation1 [shape = 'u32[144,128]{1,0:T(1,128)}', space=vmem, size = 0x12000, scoped, tag = 'internal scratch']
  %s0 = inlined_call_operand.vmem [shape: f32[2,3,8,256], index: 0, kind: input, shape index: {}]
  %s1 = inlined_call_operand.vmem [shape: f32[1,8,1], index: 1, kind: input, shape index: {}]
  %s2 = inlined_call_operand.vmem [shape: f32[1,8,1], index: 2, kind: input, shape index: {}]
  %s3 = inlined_call_operand.vmem [shape: f32[2,8,16,256], index: 3, kind: output, shape index: {}]
  %s4 = sld [smem:[#allocation0]]
  $region45: #{skip_upsample_3d.5} parent=0
    _
  %s6 = ssub.s32 1, %s4
  %s7 = scalar_select 0, %s6, %s4
  loop: start=0, step=1, limit=4
  $region2: #{skip_upsample_3d.5} parent=0 // loop_pre_header
    _
  $region3: #{skip_upsample_3d.5} parent=0 // loop_header
    %s9 = sphi 0, %s13
    %p10 = scmp.ge.s32.totalorder %s9, 4
    %s16 = sphi 0, %s35
    %s17 = sphi 0, %s31
    %s18 = sphi 0, %s27
    %s19 = sphi 0, %s16
    %s20 = sphi 0, %s17
    %s21 = sphi 0, %s18
    %s22 = sphi 0, %s19
    %s23 = sphi 0, %s20
    %s24 = sphi 0, %s21
    %s42 = sphi 0, %s44
    %s45 = sphi 0, %s42
    %s46 = sphi 0, %s45
    %s62 = sphi 0, %s46
    %s68 = sphi 0, %s70
    %s71 = sphi 0, %s68
    %s72 = sphi 0, %s71
    %s88 = sphi 0, %s72
    %s94 = sphi 0, %s96
    %s97 = sphi 0, %s94
    %s98 = sphi 0, %s97
    %s114 = sphi 0, %s98
    %s124 = sphi 0, %s126
    %s127 = sphi 0, %s124
    %s128 = sphi 0, %s127
    %s144 = sphi 0, %s128
  $region4: #{skip_upsample_3d.5} parent=0 // loop_header_branch
    %12 = sbr.rel (%p10) target = $region8
  $region5: #{skip_upsample_3d.5} parent=0 // loop_body
    %s14 = ssub.s32 %s9, 1
    %s15 = ssub.s32 %s9, 2
    %s25 = sadd.s32 1, %s18
    %p26 = scmp.ge.s32.totalorder %s25, 1
    %s27 = scalar_select %p26, 0, %s25
    %s28 = sadd.s32 1, %s17
    %s29 = scalar_select %p26, %s28, %s17
    %p30 = scmp.ge.s32.totalorder %s29, 1
    %s31 = scalar_select %p30, 0, %s29
    %s32 = sadd.s32 1, %s16
    %s33 = scalar_select %p30, %s32, %s16
    %p34 = scmp.ge.s32.totalorder %s33, 2
    %s35 = scalar_select %p34, 0, %s33
    %s36 = ssub.s32 %s16, %s35
    %s37 = ssub.s32 %s17, %s31
    %s38 = sor.u32 %s36, %s37
    %s39 = ssub.s32 %s18, %s27
    %s40 = sor.u32 %s38, %s39
    %p41 = scmp.eq.s32.totalorder %s40, 0
    %s43 = sadd.s32 %s42, 1
    %s44 = scalar_select %p41, %s42, %s43
    %p47 = pneg %p41
    %p48 = scmp.eq.s32.totalorder %s9, 1
    %p49 = por %p47, %p48
    %p50 = scmp.ne.s32.totalorder %s42, %s45
    %p51 = scmp.eq.s32.totalorder %s9, 0
    %p52 = por %p50, %p51
    %p53 = scmp.ne.s32.totalorder %s42, %s45
    %p54 = scmp.eq.s32.totalorder %s14, 1
    %p55 = por %p53, %p54
    %p56 = scmp.ne.s32.totalorder %s45, %s46
    %p57 = scmp.eq.s32.totalorder %s14, 0
    %p58 = por %p56, %p57
    %p59 = scmp.ne.s32.totalorder %s45, %s46
    %p60 = scmp.eq.s32.totalorder %s15, 1
    %p61 = por %p59, %p60
    %p63 = scmp.ne.s32.totalorder %s46, %s62
    %p64 = scmp.eq.s32.totalorder %s15, 0
    %p65 = por %p63, %p64
    %s66 = ssub.s32 %s17, %s31
    %p67 = scmp.eq.s32.totalorder %s66, 0
    %s69 = sadd.s32 %s68, 1
    %s70 = scalar_select %p67, %s68, %s69
    %p73 = pneg %p67
    %p74 = scmp.eq.s32.totalorder %s9, 1
    %p75 = por %p73, %p74
    %p76 = scmp.ne.s32.totalorder %s68, %s71
    %p77 = scmp.eq.s32.totalorder %s9, 0
    %p78 = por %p76, %p77
    %p79 = scmp.ne.s32.totalorder %s68, %s71
    %p80 = scmp.eq.s32.totalorder %s14, 1
    %p81 = por %p79, %p80
    %p82 = scmp.ne.s32.totalorder %s71, %s72
    %p83 = scmp.eq.s32.totalorder %s14, 0
    %p84 = por %p82, %p83
    %p85 = scmp.ne.s32.totalorder %s71, %s72
    %p86 = scmp.eq.s32.totalorder %s15, 1
    %p87 = por %p85, %p86
    %p89 = scmp.ne.s32.totalorder %s72, %s88
    %p90 = scmp.eq.s32.totalorder %s15, 0
    %p91 = por %p89, %p90
    %s92 = ssub.s32 %s17, %s31
    %p93 = scmp.eq.s32.totalorder %s92, 0
    %s95 = sadd.s32 %s94, 1
    %s96 = scalar_select %p93, %s94, %s95
    %p99 = pneg %p93
    %p100 = scmp.eq.s32.totalorder %s9, 1
    %p101 = por %p99, %p100
    %p102 = scmp.ne.s32.totalorder %s94, %s97
    %p103 = scmp.eq.s32.totalorder %s9, 0
    %p104 = por %p102, %p103
    %p105 = scmp.ne.s32.totalorder %s94, %s97
    %p106 = scmp.eq.s32.totalorder %s14, 1
    %p107 = por %p105, %p106
    %p108 = scmp.ne.s32.totalorder %s97, %s98
    %p109 = scmp.eq.s32.totalorder %s14, 0
    %p110 = por %p108, %p109
    %p111 = scmp.ne.s32.totalorder %s97, %s98
    %p112 = scmp.eq.s32.totalorder %s15, 1
    %p113 = por %p111, %p112
    %p115 = scmp.ne.s32.totalorder %s98, %s114
    %p116 = scmp.eq.s32.totalorder %s15, 0
    %p117 = por %p115, %p116
    %s118 = ssub.s32 %s16, %s35
    %s119 = ssub.s32 %s17, %s31
    %s120 = sor.u32 %s118, %s119
    %s121 = ssub.s32 %s18, %s27
    %s122 = sor.u32 %s120, %s121
    %p123 = scmp.eq.s32.totalorder %s122, 0
    %s125 = sadd.s32 %s124, 1
    %s126 = scalar_select %p123, %s124, %s125
    %p129 = pneg %p123
    %p130 = scmp.eq.s32.totalorder %s9, 1
    %p131 = por %p129, %p130
    %p132 = scmp.ne.s32.totalorder %s124, %s127
    %p133 = scmp.eq.s32.totalorder %s9, 0
    %p134 = por %p132, %p133
    %p135 = scmp.ne.s32.totalorder %s124, %s127
    %p136 = scmp.eq.s32.totalorder %s14, 1
    %p137 = por %p135, %p136
    %p138 = scmp.ne.s32.totalorder %s127, %s128
    %p139 = scmp.eq.s32.totalorder %s14, 0
    %p140 = por %p138, %p139
    %p141 = scmp.ne.s32.totalorder %s127, %s128
    %p142 = scmp.eq.s32.totalorder %s15, 1
    %p143 = por %p141, %p142
    %p145 = scmp.ne.s32.totalorder %s128, %s144
    %p146 = scmp.eq.s32.totalorder %s15, 0
    %p147 = por %p145, %p146
    %p148 = scmp.le.s32.totalorder 1, %s9
    %p149 = scmp.lt.s32.totalorder %s9, 3
    %p150 = pnand %p148, %p149
    %p151 = pneg %p150
    // Predicated region
    $region9: #{skip_upsample_3d.5} parent=5 // pred_check
      _
    $region10: #{skip_upsample_3d.5} parent=5 // pred_check_branch
      %153 = sbr.rel (%p150) target = $region12
    $region11: #{skip_upsample_3d.5} parent=5 // pred_region
      %s154 = ssub.s32 %s9, 1
      // Predicated region
      $region13: #{skip_upsample_3d.5} parent=11 // pred_check
        %p155 = pneg %p84
      $region14: #{skip_upsample_3d.5} parent=11 // pred_check_branch
        %157 = sbr.rel (%p155) target = $region16
      $region15: #{skip_upsample_3d.5} parent=11 // pred_region
        %p158 = scmp.lt.s32.totalorder %s20, 0
        %s159 = scalar_select %p158, %s20, 0
        %s160 = smul.addr %s159, 8
        %s161 = scalar_lea.vmem %s1, %s160
      $region16: #{skip_upsample_3d.5} parent=11 // pred_fallthru
        _
      // Predicated region
      $region17: #{skip_upsample_3d.5} parent=11 // pred_check
        %p162 = pneg %p110
      $region18: #{skip_upsample_3d.5} parent=11 // pred_check_branch
        %164 = sbr.rel (%p162) target = $region20
      $region19: #{skip_upsample_3d.5} parent=11 // pred_region
        %p165 = scmp.lt.s32.totalorder %s20, 0
        %s166 = scalar_select %p165, %s20, 0
        %s167 = smul.addr %s166, 8
        %s168 = scalar_lea.vmem %s2, %s167
      $region20: #{skip_upsample_3d.5} parent=11 // pred_fallthru
        _
    $region12: #{skip_upsample_3d.5} parent=5 // pred_fallthru
      _
    %p169 = scmp.lt.s32.totalorder %s9, 2
    // Predicated region
    $region21: #{skip_upsample_3d.5} parent=5 // pred_check
      %p170 = pneg %p169
    $region22: #{skip_upsample_3d.5} parent=5 // pred_check_branch
      %172 = sbr.rel (%p170) target = $region24
    $region23: #{skip_upsample_3d.5} parent=5 // pred_region
      // Predicated region
      $region25: #{skip_upsample_3d.5} parent=23 // pred_check
        %p173 = pneg %p52
      $region26: #{skip_upsample_3d.5} parent=23 // pred_check_branch
        %175 = sbr.rel (%p173) target = $region28
      $region27: #{skip_upsample_3d.5} parent=23 // pred_region
        %s176 = smul.u32 2, %s18
        %p177 = scmp.lt.s32.totalorder %s16, 1
        %s178 = scalar_select %p177, %s16, 1
        %p179 = scmp.lt.s32.totalorder %s17, 0
        %s180 = scalar_select %p179, %s17, 0
        %p181 = scmp.lt.s32.totalorder %s176, 1
        %s182 = scalar_select %p181, %s176, 1
        %s183 = smul.addr %s180, 2
        %s184 = sadd.s32 %s182, %s183
        %s185 = smul.addr %s178, 6
        %s186 = sadd.s32 %s184, %s185
        %s187 = smul.addr %s186, 8
        %s188 = scalar_lea.vmem %s0, %s187
        %s189 = smul.u32 2, %s18
      $region28: #{skip_upsample_3d.5} parent=23 // pred_fallthru
        _
    $region24: #{skip_upsample_3d.5} parent=5 // pred_fallthru
      _
    %p190 = scmp.le.s32.totalorder 1, %s9
    %p191 = scmp.lt.s32.totalorder %s9, 3
    %p192 = pnand %p190, %p191
    %p193 = pneg %p192
    // Predicated region
    $region29: #{skip_upsample_3d.5} parent=5 // pred_check
      _
    $region30: #{skip_upsample_3d.5} parent=5 // pred_check_branch
      %195 = sbr.rel (%p192) target = $region32
    $region31: #{skip_upsample_3d.5} parent=5 // pred_region
      %s196 = ssub.s32 %s9, 1
      %s197 = smul.u32 2, %s21
      %p198 = scmp.lt.s32.totalorder %s19, 1
      %s199 = scalar_select %p198, %s19, 1
      %p200 = scmp.lt.s32.totalorder %s20, 0
      %s201 = scalar_select %p200, %s20, 0
      %p202 = scmp.lt.s32.totalorder %s197, 1
      %s203 = scalar_select %p202, %s197, 1
      %s204 = smul.addr %s201, 2
      %s205 = sadd.s32 %s203, %s204
      %s206 = smul.addr %s199, 6
      %s207 = sadd.s32 %s205, %s206
      %s208 = smul.addr %s207, 8
      %s209 = scalar_lea.vmem %s0, %s208
      %p210 = pneg %p58
      %p211 = pneg %p55
      %p212 = scmp.lt.s32.totalorder %s20, 0
      %s213 = scalar_select %p212, %s20, 0
      %s214 = smul.addr %s213, 8
      %s215 = scalar_lea.vmem %s1, %s214
      %p216 = pneg %p84
      %p217 = pneg %p81
      %p218 = scmp.lt.s32.totalorder %s20, 0
      %s219 = scalar_select %p218, %s20, 0
      %s220 = smul.addr %s219, 8
      %s221 = scalar_lea.vmem %s2, %s220
      %p222 = pneg %p110
      %p223 = pneg %p107
      %p224 = pneg %p140
      %p225 = pneg %p137
      %s226 = smul.u32 8, %s20
      %s227 = smul.u32 2, %s21
      %p228 = scmp.lt.s32.totalorder %s19, 1
      %s229 = scalar_select %p228, %s19, 1
      %p230 = scmp.lt.s32.totalorder %s226, 7
      %s231 = scalar_select %p230, %s226, 7
      %p232 = scmp.lt.s32.totalorder %s227, 1
      %s233 = scalar_select %p232, %s227, 1
      %s234 = smul.addr %s231, 4
      %s235 = sadd.s32 %s233, %s234
      %s236 = smul.addr %s229, 32
      %s237 = sadd.s32 %s235, %s236
      %s238 = smul.addr %s237, 8
      %s239 = scalar_lea.vmem %s3, %s238
      %s240 = smul.u32 2, %s21
      %p241 = scmp.lt.s32.totalorder %s19, 1
      %s242 = scalar_select %p241, %s19, 1
      %p243 = scmp.lt.s32.totalorder %s20, 0
      %s244 = scalar_select %p243, %s20, 0
      %p245 = scmp.lt.s32.totalorder %s240, 1
      %s246 = scalar_select %p245, %s240, 1
      %s247 = smul.addr %s244, 2
      %s248 = sadd.s32 %s246, %s247
      %s249 = smul.addr %s242, 6
      %s250 = sadd.s32 %s248, %s249
      %s251 = smul.addr %s250, 8
      %s252 = scalar_lea.vmem %s0, %s251
      %s253 = smul.u32 2, %s21
      %p254 = scmp.lt.s32.totalorder %s20, 0
      %s255 = scalar_select %p254, %s20, 0
      %s256 = smul.addr %s255, 8
      %s257 = scalar_lea.vmem %s1, %s256
      %p258 = scmp.lt.s32.totalorder %s20, 0
      %s259 = scalar_select %p258, %s20, 0
      %s260 = smul.addr %s259, 8
      %s261 = scalar_lea.vmem %s2, %s260
      %s262 = smul.u32 8, %s20
      %s263 = smul.u32 2, %s21
      %p264 = scmp.lt.s32.totalorder %s19, 1
      %s265 = scalar_select %p264, %s19, 1
      %p266 = scmp.lt.s32.totalorder %s262, 7
      %s267 = scalar_select %p266, %s262, 7
      %p268 = scmp.lt.s32.totalorder %s263, 1
      %s269 = scalar_select %p268, %s263, 1
      %s270 = smul.addr %s267, 4
      %s271 = sadd.s32 %s269, %s270
      %s272 = smul.addr %s265, 32
      %s273 = sadd.s32 %s271, %s272
      %s274 = smul.addr %s273, 8
      %s275 = scalar_lea.vmem %s3, %s274
      %s276 = smul.u32 8, %s20
      %s277 = smul.u32 2, %s21
      %v278 = vld [vmem:[%s252] sm:$0xff]
      %v279 = vld [vmem:[%s252 + $0x8] sm:$0xff]
      %v280 = vld [vmem:[%s252 + $0x10] sm:$0xff]
      %v281 = vld [vmem:[%s252 + $0x18] sm:$0xff]
      %v282 = vld [vmem:[%s252 + $0x20] sm:$0xff]
      %v283 = vld [vmem:[%s252 + $0x28] sm:$0xff]
      %v284 = vld [vmem:[%s257] sm:$0xff]
      %286 = vset.pattern.permute.xlu0 0
      %287 = vperm.xlu0 %286, %v284
      %v288 = vpop.permute.xlu0 %287
      %v290 = vmul.f32 %v278, %v288
      %v291 = vmul.f32 %v279, %v288
      %v292 = vmul.f32 %v280, %v288
      %v293 = vmul.f32 %v281, %v288
      %v294 = vmul.f32 %v282, %v288
      %v295 = vmul.f32 %v283, %v288
      %v296 = vld [vmem:[%s261] sm:$0xff]
      %298 = vset.pattern.permute.xlu0 0
      %299 = vperm.xlu0 %298, %v296
      %v300 = vpop.permute.xlu0 %299
      %v302 = vadd.f32 %v290, %v300
      %v303 = vadd.f32 %v291, %v300
      %v304 = vadd.f32 %v292, %v300
      %v305 = vadd.f32 %v293, %v300
      %v306 = vadd.f32 %v294, %v300
      %v307 = vadd.f32 %v295, %v300
      %v308 = vmax.f32 %v302, 0.0
      %v309 = vmax.f32 %v303, 0.0
      %v310 = vmax.f32 %v304, 0.0
      %v311 = vmax.f32 %v305, 0.0
      %v312 = vmax.f32 %v306, 0.0
      %v313 = vmax.f32 %v307, 0.0
      %v314 = vmin.f32 %v308, 6.0
      %v315 = vmin.f32 %v309, 6.0
      %v316 = vmin.f32 %v310, 6.0
      %v317 = vmin.f32 %v311, 6.0
      %v318 = vmin.f32 %v312, 6.0
      %v319 = vmin.f32 %v313, 6.0
      %v322 = vcombine.low %v314, %v315
      %v323 = vcombine.high %v314, %v315
      %v325 = vunpack.c.l.s4 1966171168
      %v326 = vunpack.c.0.s8 %v325
      %v327 = vlaneseq
      %v328 = vshrl.u32 %v327, 7
      %v329 = vsub.s32 %v326, %v328
      %v330 = vrot.slane %v322, %v329
      %v332 = vunpack.c.l.s4 1966171168
      %v333 = vunpack.c.0.s8 %v332
      %v334 = vlaneseq
      %v335 = vshrl.u32 %v334, 7
      %v336 = vsub.s32 %v333, %v335
      %v337 = vrot.slane %v323, %v336
      %v338 = vcombine.high %v330, %v330
      %v339 = vcombine.high %v337, %v337
      %v341 = vunpack.c.l.s4 1966171168
      %v342 = vunpack.c.0.s8 %v341
      %v343 = vlaneseq
      %v344 = vshrl.u32 %v343, 7
      %v345 = vsub.s32 %v342, %v344
      %v346 = vrot.slane %v330, %v345
      %v348 = vunpack.c.l.s4 1966171168
      %v349 = vunpack.c.0.s8 %v348
      %v350 = vlaneseq
      %v351 = vshrl.u32 %v350, 7
      %v352 = vsub.s32 %v349, %v351
      %v353 = vrot.slane %v337, %v352
      %v355 = vunpack.c.l.s4 1966171168
      %v356 = vunpack.c.0.s8 %v355
      %v357 = vlaneseq
      %v358 = vshrl.u32 %v357, 7
      %v359 = vsub.s32 %v356, %v358
      %v360 = vrot.slane %v338, %v359
      %v362 = vunpack.c.l.s4 1966171168
      %v363 = vunpack.c.0.s8 %v362
      %v364 = vlaneseq
      %v365 = vshrl.u32 %v364, 7
      %v366 = vsub.s32 %v363, %v365
      %v367 = vrot.slane %v339, %v366
      %v368 = vcombine.high %v346, %v346
      %v369 = vcombine.high %v353, %v353
      %v370 = vcombine.high %v360, %v360
      %v371 = vcombine.high %v367, %v367
      %v380 = vlaneseq
      %vm381 = vcmp.ge.s32.totalorder %v380, 0
      %vm382 = vcmp.lt.s32.totalorder %v380, 256
      %vm383 = vmand %vm381, %vm382
      %384 = vst.msk [vmem:[%s275] ss:$8 sm:$0x3] %vm383, %v346
      %385 = vst.msk [vmem:[%s275] ss:$8 sm:$0x0] %vm383, %v346
      %s386 = scalar_lea.vmem %s275, 32
      %387 = vst.msk [vmem:[%s386] ss:$8 sm:$0x3] %vm383, %v360
      %388 = vst.msk [vmem:[%s386] ss:$8 sm:$0x0] %vm383, %v360
      %s389 = scalar_lea.vmem %s275, 64
      %390 = vst.msk [vmem:[%s389] ss:$8 sm:$0x3] %vm383, %v368
      %391 = vst.msk [vmem:[%s389] ss:$8 sm:$0x0] %vm383, %v368
      %s392 = scalar_lea.vmem %s275, 96
      %393 = vst.msk [vmem:[%s392] ss:$8 sm:$0x3] %vm383, %v370
      %394 = vst.msk [vmem:[%s392] ss:$8 sm:$0x0] %vm383, %v370
      %s395 = scalar_lea.vmem %s275, 128
      %396 = vst.msk [vmem:[%s395] ss:$8 sm:$0x3] %vm383, %v353
      %397 = vst.msk [vmem:[%s395] ss:$8 sm:$0x0] %vm383, %v353
      %s398 = scalar_lea.vmem %s275, 160
      %399 = vst.msk [vmem:[%s398] ss:$8 sm:$0x3] %vm383, %v367
      %400 = vst.msk [vmem:[%s398] ss:$8 sm:$0x0] %vm383, %v367
      %s401 = scalar_lea.vmem %s275, 192
      %402 = vst.msk [vmem:[%s401] ss:$8 sm:$0x3] %vm383, %v369
      %403 = vst.msk [vmem:[%s401] ss:$8 sm:$0x0] %vm383, %v369
      %s404 = scalar_lea.vmem %s275, 224
      %405 = vst.msk [vmem:[%s404] ss:$8 sm:$0x3] %vm383, %v371
      %406 = vst.msk [vmem:[%s404] ss:$8 sm:$0x0] %vm383, %v371
      %v409 = vcombine.low %v316, %v317
      %v410 = vcombine.high %v316, %v317
      %v412 = vunpack.c.l.s4 1966171168
      %v413 = vunpack.c.0.s8 %v412
      %v414 = vlaneseq
      %v415 = vshrl.u32 %v414, 7
      %v416 = vsub.s32 %v413, %v415
      %v417 = vrot.slane %v409, %v416
      %v419 = vunpack.c.l.s4 1966171168
      %v420 = vunpack.c.0.s8 %v419
      %v421 = vlaneseq
      %v422 = vshrl.u32 %v421, 7
      %v423 = vsub.s32 %v420, %v422
      %v424 = vrot.slane %v410, %v423
      %v425 = vcombine.high %v417, %v417
      %v426 = vcombine.high %v424, %v424
      %v428 = vunpack.c.l.s4 1966171168
      %v429 = vunpack.c.0.s8 %v428
      %v430 = vlaneseq
      %v431 = vshrl.u32 %v430, 7
      %v432 = vsub.s32 %v429, %v431
      %v433 = vrot.slane %v417, %v432
      %v435 = vunpack.c.l.s4 1966171168
      %v436 = vunpack.c.0.s8 %v435
      %v437 = vlaneseq
      %v438 = vshrl.u32 %v437, 7
      %v439 = vsub.s32 %v436, %v438
      %v440 = vrot.slane %v424, %v439
      %v442 = vunpack.c.l.s4 1966171168
      %v443 = vunpack.c.0.s8 %v442
      %v444 = vlaneseq
      %v445 = vshrl.u32 %v444, 7
      %v446 = vsub.s32 %v443, %v445
      %v447 = vrot.slane %v425, %v446
      %v449 = vunpack.c.l.s4 1966171168
      %v450 = vunpack.c.0.s8 %v449
      %v451 = vlaneseq
      %v452 = vshrl.u32 %v451, 7
      %v453 = vsub.s32 %v450, %v452
      %v454 = vrot.slane %v426, %v453
      %v455 = vcombine.high %v433, %v433
      %v456 = vcombine.high %v440, %v440
      %v457 = vcombine.high %v447, %v447
      %v458 = vcombine.high %v454, %v454
      %v459 = vlaneseq
      %v460 = vshrl.u32 %v459, 7
      %v461 = vsub.s32 0, %v460
      %v462 = vrot.slane %v433, %v461
      %v463 = vlaneseq
      %v464 = vshrl.u32 %v463, 7
      %v465 = vsub.s32 1, %v464
      %v466 = vrot.slane %v433, %v465
      %v467 = vlaneseq
      %v468 = vshrl.u32 %v467, 7
      %v469 = vsub.s32 0, %v468
      %v470 = vrot.slane %v447, %v469
      %v471 = vlaneseq
      %v472 = vshrl.u32 %v471, 7
      %v473 = vsub.s32 1, %v472
      %v474 = vrot.slane %v447, %v473
      %v475 = vlaneseq
      %v476 = vshrl.u32 %v475, 7
      %v477 = vsub.s32 0, %v476
      %v478 = vrot.slane %v455, %v477
      %v479 = vlaneseq
      %v480 = vshrl.u32 %v479, 7
      %v481 = vsub.s32 1, %v480
      %v482 = vrot.slane %v455, %v481
      %v483 = vlaneseq
      %v484 = vshrl.u32 %v483, 7
      %v485 = vsub.s32 0, %v484
      %v486 = vrot.slane %v457, %v485
      %v487 = vlaneseq
      %v488 = vshrl.u32 %v487, 7
      %v489 = vsub.s32 1, %v488
      %v490 = vrot.slane %v457, %v489
      %v491 = vlaneseq
      %v492 = vshrl.u32 %v491, 7
      %v493 = vsub.s32 0, %v492
      %v494 = vrot.slane %v440, %v493
      %v495 = vlaneseq
      %v496 = vshrl.u32 %v495, 7
      %v497 = vsub.s32 1, %v496
      %v498 = vrot.slane %v440, %v497
      %v499 = vlaneseq
      %v500 = vshrl.u32 %v499, 7
      %v501 = vsub.s32 0, %v500
      %v502 = vrot.slane %v454, %v501
      %v503 = vlaneseq
      %v504 = vshrl.u32 %v503, 7
      %v505 = vsub.s32 1, %v504
      %v506 = vrot.slane %v454, %v505
      %v507 = vlaneseq
      %v508 = vshrl.u32 %v507, 7
      %v509 = vsub.s32 0, %v508
      %v510 = vrot.slane %v456, %v509
      %v511 = vlaneseq
      %v512 = vshrl.u32 %v511, 7
      %v513 = vsub.s32 1, %v512
      %v514 = vrot.slane %v456, %v513
      %v515 = vlaneseq
      %v516 = vshrl.u32 %v515, 7
      %v517 = vsub.s32 0, %v516
      %v518 = vrot.slane %v458, %v517
      %v519 = vlaneseq
      %v520 = vshrl.u32 %v519, 7
      %v521 = vsub.s32 1, %v520
      %v522 = vrot.slane %v458, %v521
      %539 = vst [vmem:[%s275] sm:$0xfe] %v462
      %540 = vst [vmem:[%s275 + $0x8] sm:$0xfe] %v466
      %541 = vst [vmem:[%s275 + $0x10] sm:$0x7f] %v462
      %542 = vst [vmem:[%s275 + $0x18] sm:$0x7f] %v466
      %543 = vst [vmem:[%s275 + $0x20] sm:$0xfe] %v470
      %544 = vst [vmem:[%s275 + $0x28] sm:$0xfe] %v474
      %545 = vst [vmem:[%s275 + $0x30] sm:$0x7f] %v470
      %546 = vst [vmem:[%s275 + $0x38] sm:$0x7f] %v474
      %547 = vst [vmem:[%s275 + $0x40] sm:$0xfe] %v478
      %548 = vst [vmem:[%s275 + $0x48] sm:$0xfe] %v482
      %549 = vst [vmem:[%s275 + $0x50] sm:$0x7f] %v478
      %550 = vst [vmem:[%s275 + $0x58] sm:$0x7f] %v482
      %551 = vst [vmem:[%s275 + $0x60] sm:$0xfe] %v486
      %552 = vst [vmem:[%s275 + $0x68] sm:$0xfe] %v490
      %553 = vst [vmem:[%s275 + $0x70] sm:$0x7f] %v486
      %554 = vst [vmem:[%s275 + $0x78] sm:$0x7f] %v490
      %555 = vst [vmem:[%s275 + $0x80] sm:$0xfe] %v494
      %556 = vst [vmem:[%s275 + $0x88] sm:$0xfe] %v498
      %557 = vst [vmem:[%s275 + $0x90] sm:$0x7f] %v494
      %558 = vst [vmem:[%s275 + $0x98] sm:$0x7f] %v498
      %559 = vst [vmem:[%s275 + $0xa0] sm:$0xfe] %v502
      %560 = vst [vmem:[%s275 + $0xa8] sm:$0xfe] %v506
      %561 = vst [vmem:[%s275 + $0xb0] sm:$0x7f] %v502
      %562 = vst [vmem:[%s275 + $0xb8] sm:$0x7f] %v506
      %563 = vst [vmem:[%s275 + $0xc0] sm:$0xfe] %v510
      %564 = vst [vmem:[%s275 + $0xc8] sm:$0xfe] %v514
      %565 = vst [vmem:[%s275 + $0xd0] sm:$0x7f] %v510
      %566 = vst [vmem:[%s275 + $0xd8] sm:$0x7f] %v514
      %567 = vst [vmem:[%s275 + $0xe0] sm:$0xfe] %v518
      %568 = vst [vmem:[%s275 + $0xe8] sm:$0xfe] %v522
      %569 = vst [vmem:[%s275 + $0xf0] sm:$0x7f] %v518
      %570 = vst [vmem:[%s275 + $0xf8] sm:$0x7f] %v522
      %v573 = vcombine.low %v318, %v319
      %v574 = vcombine.high %v318, %v319
      %v576 = vunpack.c.l.s4 1966171168
      %v577 = vunpack.c.0.s8 %v576
      %v578 = vlaneseq
      %v579 = vshrl.u32 %v578, 7
      %v580 = vsub.s32 %v577, %v579
      %v581 = vrot.slane %v573, %v580
      %v583 = vunpack.c.l.s4 1966171168
      %v584 = vunpack.c.0.s8 %v583
      %v585 = vlaneseq
      %v586 = vshrl.u32 %v585, 7
      %v587 = vsub.s32 %v584, %v586
      %v588 = vrot.slane %v574, %v587
      %v589 = vcombine.high %v581, %v581
      %v590 = vcombine.high %v588, %v588
      %v592 = vunpack.c.l.s4 1966171168
      %v593 = vunpack.c.0.s8 %v592
      %v594 = vlaneseq
      %v595 = vshrl.u32 %v594, 7
      %v596 = vsub.s32 %v593, %v595
      %v597 = vrot.slane %v581, %v596
      %v599 = vunpack.c.l.s4 1966171168
      %v600 = vunpack.c.0.s8 %v599
      %v601 = vlaneseq
      %v602 = vshrl.u32 %v601, 7
      %v603 = vsub.s32 %v600, %v602
      %v604 = vrot.slane %v588, %v603
      %v606 = vunpack.c.l.s4 1966171168
      %v607 = vunpack.c.0.s8 %v606
      %v608 = vlaneseq
      %v609 = vshrl.u32 %v608, 7
      %v610 = vsub.s32 %v607, %v609
      %v611 = vrot.slane %v589, %v610
      %v613 = vunpack.c.l.s4 1966171168
      %v614 = vunpack.c.0.s8 %v613
      %v615 = vlaneseq
      %v616 = vshrl.u32 %v615, 7
      %v617 = vsub.s32 %v614, %v616
      %v618 = vrot.slane %v590, %v617
      %v619 = vcombine.high %v597, %v597
      %v620 = vcombine.high %v604, %v604
      %v621 = vcombine.high %v611, %v611
      %v622 = vcombine.high %v618, %v618
      %s631 = scalar_lea.vmem %s275, 23
      %632 = vst.msk [vmem:[%s631] ss:$8 sm:$0x3] %vm383, %v597
      %633 = vst.msk [vmem:[%s631] ss:$8 sm:$0x0] %vm383, %v597
      %s634 = scalar_lea.vmem %s275, 55
      %635 = vst.msk [vmem:[%s634] ss:$8 sm:$0x3] %vm383, %v611
      %636 = vst.msk [vmem:[%s634] ss:$8 sm:$0x0] %vm383, %v611
      %s637 = scalar_lea.vmem %s275, 87
      %638 = vst.msk [vmem:[%s637] ss:$8 sm:$0x3] %vm383, %v619
      %639 = vst.msk [vmem:[%s637] ss:$8 sm:$0x0] %vm383, %v619
      %s640 = scalar_lea.vmem %s275, 119
      %641 = vst.msk [vmem:[%s640] ss:$8 sm:$0x3] %vm383, %v621
      %642 = vst.msk [vmem:[%s640] ss:$8 sm:$0x0] %vm383, %v621
      %s643 = scalar_lea.vmem %s275, 151
      %644 = vst.msk [vmem:[%s643] ss:$8 sm:$0x3] %vm383, %v604
      %645 = vst.msk [vmem:[%s643] ss:$8 sm:$0x0] %vm383, %v604
      %s646 = scalar_lea.vmem %s275, 183
      %647 = vst.msk [vmem:[%s646] ss:$8 sm:$0x3] %vm383, %v618
      %648 = vst.msk [vmem:[%s646] ss:$8 sm:$0x0] %vm383, %v618
      %s649 = scalar_lea.vmem %s275, 215
      %650 = vst.msk [vmem:[%s649] ss:$8 sm:$0x3] %vm383, %v620
      %651 = vst.msk [vmem:[%s649] ss:$8 sm:$0x0] %vm383, %v620
      %s652 = scalar_lea.vmem %s275, 247
      %653 = vst.msk [vmem:[%s652] ss:$8 sm:$0x3] %vm383, %v622
      %654 = vst.msk [vmem:[%s652] ss:$8 sm:$0x0] %vm383, %v622
      %s655 = smul.u32 8, %s20
      %s656 = smul.u32 2, %s21
      %p657 = scmp.lt.s32.totalorder %s19, 1
      %s658 = scalar_select %p657, %s19, 1
      %p659 = scmp.lt.s32.totalorder %s655, 7
      %s660 = scalar_select %p659, %s655, 7
      %p661 = scmp.lt.s32.totalorder %s656, 1
      %s662 = scalar_select %p661, %s656, 1
      %s663 = smul.addr %s660, 4
      %s664 = sadd.s32 %s662, %s663
      %s665 = smul.addr %s658, 32
      %s666 = sadd.s32 %s664, %s665
      %s667 = smul.addr %s666, 8
      %s668 = scalar_lea.vmem %s3, %s667
      // Predicated region
      $region33: #{skip_upsample_3d.5} parent=31 // pred_check
        %p669 = pneg %p137
      $region34: #{skip_upsample_3d.5} parent=31 // pred_check_branch
        %671 = sbr.rel (%p669) target = $region36
      $region35: #{skip_upsample_3d.5} parent=31 // pred_region
        %s672 = smul.u32 8, %s20
        %s673 = smul.u32 2, %s21
      $region36: #{skip_upsample_3d.5} parent=31 // pred_fallthru
        _
    $region32: #{skip_upsample_3d.5} parent=5 // pred_fallthru
      _
    %p674 = scmp.le.s32.totalorder 2, %s9
    // Predicated region
    $region37: #{skip_upsample_3d.5} parent=5 // pred_check
      %p675 = pneg %p674
    $region38: #{skip_upsample_3d.5} parent=5 // pred_check_branch
      %677 = sbr.rel (%p675) target = $region40
    $region39: #{skip_upsample_3d.5} parent=5 // pred_region
      %s678 = ssub.s32 %s9, 2
      // Predicated region
      $region41: #{skip_upsample_3d.5} parent=39 // pred_check
        %p679 = pneg %p143
      $region42: #{skip_upsample_3d.5} parent=39 // pred_check_branch
        %681 = sbr.rel (%p679) target = $region44
      $region43: #{skip_upsample_3d.5} parent=39 // pred_region
        %s682 = smul.u32 8, %s23
        %s683 = smul.u32 2, %s24
        %p684 = scmp.lt.s32.totalorder %s22, 1
        %s685 = scalar_select %p684, %s22, 1
        %p686 = scmp.lt.s32.totalorder %s682, 7
        %s687 = scalar_select %p686, %s682, 7
        %p688 = scmp.lt.s32.totalorder %s683, 1
        %s689 = scalar_select %p688, %s683, 1
        %s690 = smul.addr %s687, 4
        %s691 = sadd.s32 %s689, %s690
        %s692 = smul.addr %s685, 32
        %s693 = sadd.s32 %s691, %s692
        %s694 = smul.addr %s693, 8
        %s695 = scalar_lea.vmem %s3, %s694
      $region44: #{skip_upsample_3d.5} parent=39 // pred_fallthru
        _
    $region40: #{skip_upsample_3d.5} parent=5 // pred_fallthru
      _
  $region6: #{skip_upsample_3d.5} parent=0 // loop_footer
    %s13 = sadd.s32 1, %s9
  $region7: #{skip_upsample_3d.5} parent=0 // loop_footer_branch
    %8 = sbr.rel target = $region3
  $region8: #{skip_upsample_3d.5} parent=0 // loop_exit
    _

</llo_original>
